<compile_context>
chip_gen: v5e
topology: v5e:2x2
jax: 0.10.0
libtpu: 0.0.40
codegen_flags: <defaults>
</compile_context>

<pallas_src>
import functools

import numpy as np
import jax
import jax.numpy as jnp
from jax.experimental import pallas as pl
from jax.experimental.pallas import tpu as pltpu


# ----------------------------------------------------------------------------
# Fused forward kernel
# ----------------------------------------------------------------------------
def _relu(x):
    return jnp.maximum(x, 0.0)


def _hardsigmoid(x):
    # torch.nn.Hardsigmoid: clip(x/6 + 1/2, 0, 1); multiply is cheaper than div.
    return jnp.clip(x * (1.0 / 6.0) + 0.5, 0.0, 1.0)


def _round_up(x, m):
    return (x + m - 1) // m * m


def _fused_forward_kernel(*refs, nlayer, dims):
    refs = list(refs)

    # ---- unpack inputs ------------------------------------------------------
    feat_ref, wpq1, bpq1, wpq2, bpq2 = refs[:5]
    pos = 5
    trunk = []
    for _ in range(nlayer):
        trunk.append((refs[pos], refs[pos + 1]))
        pos += 2
    (wh1, bh1, wh2, bh2, loscale_ref, m_ref, efet_ref, gb_ref) = refs[pos:pos + 8]
    out_ref = refs[pos + 8]

    npg, nqg, nvm, ndva = dims["npg"], dims["nqg"], dims["nvm"], dims["ndva"]
    nbranch = dims["nbranch"]
    off_vm = npg + nqg
    off_dva = off_vm + nvm
    ydim = off_dva + ndva

    def dense(x, w_r, b_r, act):
        y = jnp.dot(x, w_r[...], preferred_element_type=jnp.float32) + b_r[...]
        if act == "relu":
            return _relu(y)
        if act == "hardsigmoid":
            return _hardsigmoid(y)
        return y

    # ---- feat2pd | feat2qd (concatenated / block-diagonal weights) ----------
    x = dense(feat_ref[...], wpq1, bpq1, "relu")     # [pd_h | qd_h]
    x = dense(x, wpq2, bpq2, "relu")                 # == cat([pd, qd], dim=1)

    # ---- trunk MLP -----------------------------------------------------------
    for w_r, b_r in trunk:
        x = dense(x, w_r, b_r, "relu")

    # ---- four heads, fused & lane-dense --------------------------------------
    h = dense(x, wh1, bh1, "relu")                   # (tb, ydim)
    y = dense(h, wh2, bh2, "hardsigmoid")            # [pg | qg | vm | dva] in [0,1]

    # ---- box-constraint rescaling: scale*y + lo  (scale = hi-lo, host-side) --
    lo = loscale_ref[0:1, :]
    scale = loscale_ref[1:2, :]
    ys = scale * y + lo

    # ---- per-bus generator sums: compact 0/1 matmul over the [pg|qg] slice ---
    bus = jnp.dot(ys[:, :off_vm], m_ref[...].astype(jnp.float32),
                  preferred_element_type=jnp.float32)          # (tb, 2*nbus)

    # ---- vf|vt gather over the vm slice only (EF and ET fused) ---------------
    vfvt = jnp.dot(ys[:, off_vm:off_dva], efet_ref[...].astype(jnp.float32),
                   preferred_element_type=jnp.float32)         # (tb, 2*nbranch)
    vf = vfvt[:, :nbranch]
    vt = vfvt[:, nbranch:]

    # ---- dva is a static slice of ys already in vregs (no matmul) ------------
    dva = ys[:, off_dva:off_dva + ndva]

    # ---- AC branch flow -------------------------------------------------------
    g = gb_ref[0:1, :]
    b = gb_ref[1:2, :]
    cosd = jnp.cos(dva)
    sind = jnp.sin(dva)
    gc = g * cosd
    gs = g * sind
    bc = b * cosd
    bs = b * sind
    vf2 = vf * vf
    vt2 = vt * vt
    vprod = vf * vt

    pf = g * vf2 - vprod * (gc + bs)
    qf = -b * vf2 - vprod * (gs - bc)
    pt = g * vt2 - vprod * (gc - bs)
    qt = -b * vt2 + vprod * (gs + bc)

    # ---- single lane-dense output slab ---------------------------------------
    parts = [ys, bus, pf, qf, pt, qt]
    padw = out_ref.shape[1] - (ydim + bus.shape[1] + 4 * nbranch)
    if padw > 0:
        parts.append(jnp.zeros((ys.shape[0], padw), jnp.float32))
    out_ref[...] = jnp.concatenate(parts, axis=1)


# ----------------------------------------------------------------------------
# pallas_call wrapper
# ----------------------------------------------------------------------------
def _batch_tiling(bsz, max_tile=512):
    """Batch tile (multiple of 8, up to 512) with >= 2 grid steps (v7x megacore)."""
    tb = min(max_tile, _round_up(max(1, (bsz + 1) // 2), 8))
    bp = _round_up(bsz, tb)
    if bp // tb < 2:
        bp = 2 * tb
    return tb, bp


def _vmem_limit_bytes():
    """~3/4 of physical VMEM, capped at 96 MiB (v5e/v6e: 96 MiB, v7x: 48 MiB)."""
    try:
        phys = int(pltpu.get_tpu_info().vmem_capacity_bytes)
    except Exception:
        phys = 64 * 1024 * 1024
    return int(min(96 * 1024 * 1024, phys * 3 // 4))


def fused_forward(packed, feat):
    """One pallas_call for the whole forward pass, tiled over batch."""
    nlayer = len(packed["trunk"])
    d = packed["dims"]
    bsz, nfeat = feat.shape
    ydim = d["npg"] + d["nqg"] + d["nvm"] + d["ndva"]
    nbus2 = packed["M"].shape[1]
    nbranch = d["nbranch"]
    slab_raw = ydim + nbus2 + 4 * nbranch
    slab_w = _round_up(slab_raw, 128)        # lane-dense output slab

    tb, bp = _batch_tiling(bsz)
    if bp != bsz:
        feat = jnp.pad(feat, ((0, bp - bsz), (0, 0)))

    trunk_flat = []
    for w, b in packed["trunk"]:
        trunk_flat += [w, b]

    consts = ([packed["w_pq1"], packed["b_pq1"], packed["w_pq2"], packed["b_pq2"]]
              + trunk_flat
              + [packed["w_h1"], packed["b_h1"], packed["w_h2"], packed["b_h2"],
                 packed["lo_scale"], packed["M"], packed["EF_ET"], packed["gb"]])

    # constant blocks: same block index every grid step -> DMA'd once, resident.
    # TODO(synk): for production weight sizes, single-buffer these via
    #             pipeline_mode=pl.Buffered(1) to halve resident constant VMEM.
    in_specs = ([pl.BlockSpec((tb, nfeat), lambda i: (i, 0))]
                + [pl.BlockSpec(a.shape, lambda i: (0, 0)) for a in consts])

    out_shape = jax.ShapeDtypeStruct((bp, slab_w), jnp.float32)
    out_specs = pl.BlockSpec((tb, slab_w), lambda i: (i, 0))

    # advisory cost estimate so XLA schedules the surrounding glue sensibly
    mm_kn = ([(w.shape[0], w.shape[1]) for w in (packed["w_pq1"], packed["w_pq2"])]
             + [(w.shape[0], w.shape[1]) for w, _ in packed["trunk"]]
             + [(w.shape[0], w.shape[1]) for w in
                (packed["w_h1"], packed["w_h2"], packed["M"], packed["EF_ET"])])
    flops = int(2 * bp * sum(int(k) * int(n) for k, n in mm_kn))
    in_bytes = int(feat.size) * 4 + sum(
        int(np.prod(a.shape)) * int(a.dtype.itemsize) for a in consts)
    out_bytes = int(bp * slab_w * 4)
    cost = pl.CostEstimate(flops=flops,
                           transcendentals=int(2 * bp * nbranch),
                           bytes_accessed=in_bytes + out_bytes)

    return pl.pallas_call(
        functools.partial(_fused_forward_kernel, nlayer=nlayer, dims=d),
        out_shape=out_shape,
        grid=(bp // tb,),
        in_specs=in_specs,
        out_specs=out_specs,
        compiler_params=pltpu.CompilerParams(
            dimension_semantics=("parallel",),     # split batch grid over TCs (v7x)
            vmem_limit_bytes=_vmem_limit_bytes(),
        ),
        cost_estimate=cost,
    )(feat, *consts)


# ----------------------------------------------------------------------------
# Forward pass (semantics of NNPredoptACOPFSolver.forward)
# ----------------------------------------------------------------------------
def forward(packed, feat):
    slab = fused_forward(packed, feat)
    d = packed["dims"]
    npg, nqg, nvm, ndva = d["npg"], d["nqg"], d["nvm"], d["ndva"]
    nbus, nbranch = d["nbus"], d["nbranch"]
    ydim = npg + nqg + nvm + ndva
    bsz = feat.shape[0]

    c0 = 0
    y = slab[:bsz, c0:c0 + ydim]
    c1 = c0 + ydim
    bus = slab[:bsz, c1:c1 + 2 * nbus]
    c2 = c1 + 2 * nbus
    flow = slab[:bsz, c2:c2 + 4 * nbranch]        # [pf | qf | pt | qt]

    pg = y[:, :npg]
    qg = y[:, npg:npg + nqg]
    vm = y[:, npg + nqg:npg + nqg + nvm]
    dva = y[:, npg + nqg + nvm:ydim]
    pg_bus = bus[:, :nbus]
    qg_bus = bus[:, nbus:]

    return {"pg": pg, "qg": qg, "pg_bus": pg_bus, "qg_bus": qg_bus,
            "vm": vm, "dva": dva, "flow": flow}


# ----------------------------------------------------------------------------
# Parameter / synthetic-data construction (deterministic, in-script)
# ----------------------------------------------------------------------------
def init_linear(key, fan_in, fan_out):
    kw, kb = jax.random.split(key)
    lim = float(fan_in) ** -0.5
    w = jax.random.uniform(kw, (fan_in, fan_out), jnp.float32, -lim, lim)
    b = jax.random.uniform(kb, (fan_out,), jnp.float32, -lim, lim)
    return w, b


def build_model(key, *, nbus, ngen, nbranch, nload, nfeat, hiddenfrac, nlayer):
    npg = nqg = ngen
    nvm = nbus
    ndva = nbranch
    xdim = 2 * nload
    ydim = npg + nqg + nvm + ndva
    nhidden = int(hiddenfrac * ydim)

    keys = iter(jax.random.split(key, 64))

    # raw per-layer parameters (as the torch module would hold them)
    pd1 = init_linear(next(keys), nfeat, nload)
    pd2 = init_linear(next(keys), nload, nload)
    qd1 = init_linear(next(keys), nfeat, nload)
    qd2 = init_linear(next(keys), nload, nload)

    sizes = [xdim] + nlayer * [nhidden]
    trunk = [init_linear(next(keys), a, b) for a, b in zip(sizes[:-1], sizes[1:])]

    order = ("pg", "qg", "vm", "dva")
    head_n = {"pg": npg, "qg": nqg, "vm": nvm, "dva": ndva}
    heads1, heads2 = {}, {}
    for name in order:
        heads1[name] = init_linear(next(keys), sizes[-1], head_n[name])
        heads2[name] = init_linear(next(keys), head_n[name], head_n[name])

    # box constraints (per-element vectors, as in the OPF data object)
    pgmin = jnp.zeros((npg,), jnp.float32)
    pgmax = jnp.full((npg,), 2.0, jnp.float32)
    qgmin = jnp.full((nqg,), -1.0, jnp.float32)
    qgmax = jnp.full((nqg,), 1.0, jnp.float32)
    vmmin = jnp.full((nvm,), 0.9, jnp.float32)
    vmmax = jnp.full((nvm,), 1.1, jnp.float32)
    dvamin = jnp.full((ndva,), -0.5, jnp.float32)
    dvamax = jnp.full((ndva,), 0.5, jnp.float32)

    # bus_genidxs (nbus, maxgen) with pad index == ngen -> compact 0/1 gather matrix
    gen_bus = np.array([1, 3, 3, 7][:ngen]) % nbus
    maxgen = 2
    bus_genidxs = np.full((nbus, maxgen), ngen, dtype=np.int64)
    slot = np.zeros(nbus, dtype=np.int64)
    for gi, bi in enumerate(gen_bus):
        bus_genidxs[bi, slot[bi]] = gi
        slot[bi] += 1
    m_full = np.zeros((ngen + 1, nbus), dtype=np.float32)
    for bi in range(nbus):
        for gi in bus_genidxs[bi]:
            m_full[gi, bi] += 1.0
    m = m_full[:ngen]  # pad row contributes zero -> dropped

    # branch topology + admittances for compute_flow
    fbus = np.arange(nbranch) % nbus
    tbus = (np.arange(nbranch) + 1) % nbus
    ef = np.zeros((nbus, nbranch), np.float32)
    et = np.zeros((nbus, nbranch), np.float32)
    ef[fbus, np.arange(nbranch)] = 1.0
    et[tbus, np.arange(nbranch)] = 1.0
    g_br = (1.0 + 0.05 * np.arange(nbranch)).astype(np.float32)
    b_br = (-5.0 + 0.1 * np.arange(nbranch)).astype(np.float32)

    block_diag = jax.scipy.linalg.block_diag

    # ---- compact gather constants (only the activation slices they touch) ----
    #   M     : (npg+nqg, 2*nbus)   maps [pg|qg]   -> [pg_bus | qg_bus]
    #   EF_ET : (nvm, 2*nbranch)    maps vm        -> [vf | vt]
    # Exact 0/1 values -> stored bf16 (half the DMA/VMEM, no numerical change).
    m_cat = np.zeros((npg + nqg, 2 * nbus), np.float32)
    m_cat[0:npg, 0:nbus] = m
    m_cat[npg:npg + nqg, nbus:2 * nbus] = m
    ef_et = np.concatenate([ef, et], axis=1)

    lo = jnp.concatenate([pgmin, qgmin, vmmin, dvamin])
    hi = jnp.concatenate([pgmax, qgmax, vmmax, dvamax])

    packed = {
        "w_pq1": jnp.concatenate([pd1[0], qd1[0]], axis=1),
        "b_pq1": jnp.concatenate([pd1[1], qd1[1]]).reshape(1, -1),
        "w_pq2": block_diag(pd2[0], qd2[0]),
        "b_pq2": jnp.concatenate([pd2[1], qd2[1]]).reshape(1, -1),
        "trunk": [(w, b.reshape(1, -1)) for w, b in trunk],
        "w_h1": jnp.concatenate([heads1[n][0] for n in order], axis=1),
        "b_h1": jnp.concatenate([heads1[n][1] for n in order]).reshape(1, -1),
        "w_h2": block_diag(*[heads2[n][0] for n in order]),
        "b_h2": jnp.concatenate([heads2[n][1] for n in order]).reshape(1, -1),
        "lo_scale": jnp.stack([lo, hi - lo], axis=0),              # (2, ydim)
        "M": jnp.asarray(m_cat, jnp.bfloat16),                     # (npg+nqg, 2*nbus)
        "EF_ET": jnp.asarray(ef_et, jnp.bfloat16),                 # (nvm, 2*nbranch)
        "gb": jnp.stack([jnp.asarray(g_br), jnp.asarray(b_br)], axis=0),  # (2, nbranch)
        "dims": {"npg": npg, "nqg": nqg, "nvm": nvm, "ndva": ndva,
                 "nbus": nbus, "nbranch": nbranch},
    }

    print("X dim:%d, Y dim:%d" % (xdim, ydim), flush=True)
    return packed


# ----------------------------------------------------------------------------
if __name__ == "__main__":
    # small synthetic ACOPF sizes
    NBUS, NGEN, NBRANCH, NLOAD, NFEAT = 16, 4, 20, 8, 6
    BATCH = 2

    key = jax.random.PRNGKey(0)
    kparams, kfeat = jax.random.split(key)
    packed = build_model(kparams, nbus=NBUS, ngen=NGEN, nbranch=NBRANCH,
                         nload=NLOAD, nfeat=NFEAT, hiddenfrac=1.0, nlayer=2)

    feat = jax.random.normal(kfeat, (BATCH, NFEAT), jnp.float32)

    fwd = jax.jit(lambda f: forward(packed, f))
    outputs = fwd(feat)
    jax.block_until_ready(outputs)

    # sanity on shapes / finiteness
    assert outputs["pg"].shape == (BATCH, NGEN)
    assert outputs["qg"].shape == (BATCH, NGEN)
    assert outputs["pg_bus"].shape == (BATCH, NBUS)
    assert outputs["qg_bus"].shape == (BATCH, NBUS)
    assert outputs["vm"].shape == (BATCH, NBUS)
    assert outputs["dva"].shape == (BATCH, NBRANCH)
    assert outputs["flow"].shape == (BATCH, 4 * NBRANCH)
    assert all(np.all(np.isfinite(np.asarray(v))) for v in outputs.values())

    print("KERNEL_OK")
</pallas_src>

<mosaic_0001>
module attributes {stable_mosaic.version = 11 : i64} {
  func.func @_fused_forward_kernel(%arg0: i32, %arg1: memref<8x6xf32, #tpu.memory_space<vmem>>, %arg2: memref<6x16xf32, #tpu.memory_space<vmem>>, %arg3: memref<1x16xf32, #tpu.memory_space<vmem>>, %arg4: memref<16x16xf32, #tpu.memory_space<vmem>>, %arg5: memref<1x16xf32, #tpu.memory_space<vmem>>, %arg6: memref<16x44xf32, #tpu.memory_space<vmem>>, %arg7: memref<1x44xf32, #tpu.memory_space<vmem>>, %arg8: memref<44x44xf32, #tpu.memory_space<vmem>>, %arg9: memref<1x44xf32, #tpu.memory_space<vmem>>, %arg10: memref<44x44xf32, #tpu.memory_space<vmem>>, %arg11: memref<1x44xf32, #tpu.memory_space<vmem>>, %arg12: memref<44x44xf32, #tpu.memory_space<vmem>>, %arg13: memref<1x44xf32, #tpu.memory_space<vmem>>, %arg14: memref<2x44xf32, #tpu.memory_space<vmem>>, %arg15: memref<8x32xbf16, #tpu.memory_space<vmem>>, %arg16: memref<16x40xbf16, #tpu.memory_space<vmem>>, %arg17: memref<2x20xf32, #tpu.memory_space<vmem>>, %arg18: memref<8x256xf32, #tpu.memory_space<vmem>>) attributes {dimension_semantics = [#tpu.dimension_semantics<parallel>], iteration_bounds = array<i64: 2>, scalar_prefetch = 0 : i64, scratch_operands = 0 : i64, tpu.core_type = #tpu.core_type<tc>, window_params = [{transform_indices = @transform_0, window_bounds = array<i64: 8, 6>}, {pipeline_mode = #tpu.pipeline_mode<synchronous>, transform_indices = @transform_1, window_bounds = array<i64: 6, 16>}, {pipeline_mode = #tpu.pipeline_mode<synchronous>, transform_indices = @transform_2, window_bounds = array<i64: 1, 16>}, {pipeline_mode = #tpu.pipeline_mode<synchronous>, transform_indices = @transform_3, window_bounds = array<i64: 16, 16>}, {pipeline_mode = #tpu.pipeline_mode<synchronous>, transform_indices = @transform_4, window_bounds = array<i64: 1, 16>}, {pipeline_mode = #tpu.pipeline_mode<synchronous>, transform_indices = @transform_5, window_bounds = array<i64: 16, 44>}, {pipeline_mode = #tpu.pipeline_mode<synchronous>, transform_indices = @transform_6, window_bounds = array<i64: 1, 44>}, {pipeline_mode = #tpu.pipeline_mode<synchronous>, transform_indices = @transform_7, window_bounds = array<i64: 44, 44>}, {pipeline_mode = #tpu.pipeline_mode<synchronous>, transform_indices = @transform_8, window_bounds = array<i64: 1, 44>}, {pipeline_mode = #tpu.pipeline_mode<synchronous>, transform_indices = @transform_9, window_bounds = array<i64: 44, 44>}, {pipeline_mode = #tpu.pipeline_mode<synchronous>, transform_indices = @transform_10, window_bounds = array<i64: 1, 44>}, {pipeline_mode = #tpu.pipeline_mode<synchronous>, transform_indices = @transform_11, window_bounds = array<i64: 44, 44>}, {pipeline_mode = #tpu.pipeline_mode<synchronous>, transform_indices = @transform_12, window_bounds = array<i64: 1, 44>}, {pipeline_mode = #tpu.pipeline_mode<synchronous>, transform_indices = @transform_13, window_bounds = array<i64: 2, 44>}, {pipeline_mode = #tpu.pipeline_mode<synchronous>, transform_indices = @transform_14, window_bounds = array<i64: 8, 32>}, {pipeline_mode = #tpu.pipeline_mode<synchronous>, transform_indices = @transform_15, window_bounds = array<i64: 16, 40>}, {pipeline_mode = #tpu.pipeline_mode<synchronous>, transform_indices = @transform_16, window_bounds = array<i64: 2, 20>}, {transform_indices = @transform_17, window_bounds = array<i64: 8, 256>}]} {
    %c0 = arith.constant 0 : index
    %c0_0 = arith.constant 0 : index
    %0 = vector.load %arg1[%c0, %c0_0] : memref<8x6xf32, #tpu.memory_space<vmem>>, vector<8x6xf32>
    %c0_1 = arith.constant 0 : index
    %c0_2 = arith.constant 0 : index
    %1 = vector.load %arg2[%c0_1, %c0_2] : memref<6x16xf32, #tpu.memory_space<vmem>>, vector<6x16xf32>
    %cst = arith.constant dense<0.000000e+00> : vector<8x16xf32>
    %2 = tpu.matmul %0, %1, %cst {dimension_numbers = #tpu.dot_dimension_numbers<[1], [0], [0], [1], [0, 0, 1, 1], [], []>} : vector<8x6xf32>, vector<6x16xf32>, vector<8x16xf32> -> vector<8x16xf32>
    %c0_3 = arith.constant 0 : index
    %c0_4 = arith.constant 0 : index
    %3 = vector.load %arg3[%c0_3, %c0_4] : memref<1x16xf32, #tpu.memory_space<vmem>>, vector<1x16xf32>
    %4 = vector.broadcast %3 : vector<1x16xf32> to vector<8x16xf32>
    %5 = arith.addf %2, %4 : vector<8x16xf32>
    %cst_5 = arith.constant 0.000000e+00 : f32
    %6 = vector.broadcast %cst_5 : f32 to vector<8x16xf32>
    %7 = arith.maximumf %5, %6 : vector<8x16xf32>
    %c0_6 = arith.constant 0 : index
    %c0_7 = arith.constant 0 : index
    %8 = vector.load %arg4[%c0_6, %c0_7] : memref<16x16xf32, #tpu.memory_space<vmem>>, vector<16x16xf32>
    %cst_8 = arith.constant dense<0.000000e+00> : vector<8x16xf32>
    %9 = tpu.matmul %7, %8, %cst_8 {dimension_numbers = #tpu.dot_dimension_numbers<[1], [0], [0], [1], [0, 0, 1, 1], [], []>} : vector<8x16xf32>, vector<16x16xf32>, vector<8x16xf32> -> vector<8x16xf32>
    %c0_9 = arith.constant 0 : index
    %c0_10 = arith.constant 0 : index
    %10 = vector.load %arg5[%c0_9, %c0_10] : memref<1x16xf32, #tpu.memory_space<vmem>>, vector<1x16xf32>
    %11 = vector.broadcast %10 : vector<1x16xf32> to vector<8x16xf32>
    %12 = arith.addf %9, %11 : vector<8x16xf32>
    %cst_11 = arith.constant 0.000000e+00 : f32
    %13 = vector.broadcast %cst_11 : f32 to vector<8x16xf32>
    %14 = arith.maximumf %12, %13 : vector<8x16xf32>
    %c0_12 = arith.constant 0 : index
    %c0_13 = arith.constant 0 : index
    %15 = vector.load %arg6[%c0_12, %c0_13] : memref<16x44xf32, #tpu.memory_space<vmem>>, vector<16x44xf32>
    %cst_14 = arith.constant dense<0.000000e+00> : vector<8x44xf32>
    %16 = tpu.matmul %14, %15, %cst_14 {dimension_numbers = #tpu.dot_dimension_numbers<[1], [0], [0], [1], [0, 0, 1, 1], [], []>} : vector<8x16xf32>, vector<16x44xf32>, vector<8x44xf32> -> vector<8x44xf32>
    %c0_15 = arith.constant 0 : index
    %c0_16 = arith.constant 0 : index
    %17 = vector.load %arg7[%c0_15, %c0_16] : memref<1x44xf32, #tpu.memory_space<vmem>>, vector<1x44xf32>
    %18 = vector.broadcast %17 : vector<1x44xf32> to vector<8x44xf32>
    %19 = arith.addf %16, %18 : vector<8x44xf32>
    %cst_17 = arith.constant 0.000000e+00 : f32
    %20 = vector.broadcast %cst_17 : f32 to vector<8x44xf32>
    %21 = arith.maximumf %19, %20 : vector<8x44xf32>
    %c0_18 = arith.constant 0 : index
    %c0_19 = arith.constant 0 : index
    %22 = vector.load %arg8[%c0_18, %c0_19] : memref<44x44xf32, #tpu.memory_space<vmem>>, vector<44x44xf32>
    %cst_20 = arith.constant dense<0.000000e+00> : vector<8x44xf32>
    %23 = tpu.matmul %21, %22, %cst_20 {dimension_numbers = #tpu.dot_dimension_numbers<[1], [0], [0], [1], [0, 0, 1, 1], [], []>} : vector<8x44xf32>, vector<44x44xf32>, vector<8x44xf32> -> vector<8x44xf32>
    %c0_21 = arith.constant 0 : index
    %c0_22 = arith.constant 0 : index
    %24 = vector.load %arg9[%c0_21, %c0_22] : memref<1x44xf32, #tpu.memory_space<vmem>>, vector<1x44xf32>
    %25 = vector.broadcast %24 : vector<1x44xf32> to vector<8x44xf32>
    %26 = arith.addf %23, %25 : vector<8x44xf32>
    %cst_23 = arith.constant 0.000000e+00 : f32
    %27 = vector.broadcast %cst_23 : f32 to vector<8x44xf32>
    %28 = arith.maximumf %26, %27 : vector<8x44xf32>
    %c0_24 = arith.constant 0 : index
    %c0_25 = arith.constant 0 : index
    %29 = vector.load %arg10[%c0_24, %c0_25] : memref<44x44xf32, #tpu.memory_space<vmem>>, vector<44x44xf32>
    %cst_26 = arith.constant dense<0.000000e+00> : vector<8x44xf32>
    %30 = tpu.matmul %28, %29, %cst_26 {dimension_numbers = #tpu.dot_dimension_numbers<[1], [0], [0], [1], [0, 0, 1, 1], [], []>} : vector<8x44xf32>, vector<44x44xf32>, vector<8x44xf32> -> vector<8x44xf32>
    %c0_27 = arith.constant 0 : index
    %c0_28 = arith.constant 0 : index
    %31 = vector.load %arg11[%c0_27, %c0_28] : memref<1x44xf32, #tpu.memory_space<vmem>>, vector<1x44xf32>
    %32 = vector.broadcast %31 : vector<1x44xf32> to vector<8x44xf32>
    %33 = arith.addf %30, %32 : vector<8x44xf32>
    %cst_29 = arith.constant 0.000000e+00 : f32
    %34 = vector.broadcast %cst_29 : f32 to vector<8x44xf32>
    %35 = arith.maximumf %33, %34 : vector<8x44xf32>
    %c0_30 = arith.constant 0 : index
    %c0_31 = arith.constant 0 : index
    %36 = vector.load %arg12[%c0_30, %c0_31] : memref<44x44xf32, #tpu.memory_space<vmem>>, vector<44x44xf32>
    %cst_32 = arith.constant dense<0.000000e+00> : vector<8x44xf32>
    %37 = tpu.matmul %35, %36, %cst_32 {dimension_numbers = #tpu.dot_dimension_numbers<[1], [0], [0], [1], [0, 0, 1, 1], [], []>} : vector<8x44xf32>, vector<44x44xf32>, vector<8x44xf32> -> vector<8x44xf32>
    %c0_33 = arith.constant 0 : index
    %c0_34 = arith.constant 0 : index
    %38 = vector.load %arg13[%c0_33, %c0_34] : memref<1x44xf32, #tpu.memory_space<vmem>>, vector<1x44xf32>
    %39 = vector.broadcast %38 : vector<1x44xf32> to vector<8x44xf32>
    %40 = arith.addf %37, %39 : vector<8x44xf32>
    %cst_35 = arith.constant 0.166666672 : f32
    %41 = vector.broadcast %cst_35 : f32 to vector<8x44xf32>
    %42 = arith.mulf %40, %41 : vector<8x44xf32>
    %cst_36 = arith.constant 5.000000e-01 : f32
    %43 = vector.broadcast %cst_36 : f32 to vector<8x44xf32>
    %44 = arith.addf %42, %43 : vector<8x44xf32>
    %cst_37 = arith.constant 0.000000e+00 : f32
    %cst_38 = arith.constant 1.000000e+00 : f32
    %45 = vector.broadcast %cst_37 : f32 to vector<8x44xf32>
    %46 = arith.maximumf %45, %44 : vector<8x44xf32>
    %47 = vector.broadcast %cst_38 : f32 to vector<8x44xf32>
    %48 = arith.minimumf %47, %46 : vector<8x44xf32>
    %c0_39 = arith.constant 0 : index
    %c0_40 = arith.constant 0 : index
    %49 = vector.load %arg14[%c0_39, %c0_40] : memref<2x44xf32, #tpu.memory_space<vmem>>, vector<1x44xf32>
    %c1 = arith.constant 1 : index
    %c0_41 = arith.constant 0 : index
    %50 = vector.load %arg14[%c1, %c0_41] : memref<2x44xf32, #tpu.memory_space<vmem>>, vector<1x44xf32>
    %51 = vector.broadcast %50 : vector<1x44xf32> to vector<8x44xf32>
    %52 = arith.mulf %51, %48 : vector<8x44xf32>
    %53 = vector.broadcast %49 : vector<1x44xf32> to vector<8x44xf32>
    %54 = arith.addf %52, %53 : vector<8x44xf32>
    %55 = vector.extract_strided_slice %54 {offsets = [0, 0], sizes = [8, 8], strides = [1, 1]} : vector<8x44xf32> to vector<8x8xf32>
    %c0_42 = arith.constant 0 : index
    %c0_43 = arith.constant 0 : index
    %56 = vector.load %arg15[%c0_42, %c0_43] : memref<8x32xbf16, #tpu.memory_space<vmem>>, vector<8x32xbf16>
    %57 = arith.extf %56 : vector<8x32xbf16> to vector<8x32xf32>
    %cst_44 = arith.constant dense<0.000000e+00> : vector<8x32xf32>
    %58 = tpu.matmul %55, %57, %cst_44 {dimension_numbers = #tpu.dot_dimension_numbers<[1], [0], [0], [1], [0, 0, 1, 1], [], []>} : vector<8x8xf32>, vector<8x32xf32>, vector<8x32xf32> -> vector<8x32xf32>
    %59 = vector.extract_strided_slice %54 {offsets = [0, 8], sizes = [8, 16], strides = [1, 1]} : vector<8x44xf32> to vector<8x16xf32>
    %c0_45 = arith.constant 0 : index
    %c0_46 = arith.constant 0 : index
    %60 = vector.load %arg16[%c0_45, %c0_46] : memref<16x40xbf16, #tpu.memory_space<vmem>>, vector<16x40xbf16>
    %61 = arith.extf %60 : vector<16x40xbf16> to vector<16x40xf32>
    %cst_47 = arith.constant dense<0.000000e+00> : vector<8x40xf32>
    %62 = tpu.matmul %59, %61, %cst_47 {dimension_numbers = #tpu.dot_dimension_numbers<[1], [0], [0], [1], [0, 0, 1, 1], [], []>} : vector<8x16xf32>, vector<16x40xf32>, vector<8x40xf32> -> vector<8x40xf32>
    %63 = vector.extract_strided_slice %62 {offsets = [0, 0], sizes = [8, 20], strides = [1, 1]} : vector<8x40xf32> to vector<8x20xf32>
    %64 = vector.extract_strided_slice %62 {offsets = [0, 20], sizes = [8, 20], strides = [1, 1]} : vector<8x40xf32> to vector<8x20xf32>
    %65 = vector.extract_strided_slice %54 {offsets = [0, 24], sizes = [8, 20], strides = [1, 1]} : vector<8x44xf32> to vector<8x20xf32>
    %c0_48 = arith.constant 0 : index
    %c0_49 = arith.constant 0 : index
    %66 = vector.load %arg17[%c0_48, %c0_49] : memref<2x20xf32, #tpu.memory_space<vmem>>, vector<1x20xf32>
    %c1_50 = arith.constant 1 : index
    %c0_51 = arith.constant 0 : index
    %67 = vector.load %arg17[%c1_50, %c0_51] : memref<2x20xf32, #tpu.memory_space<vmem>>, vector<1x20xf32>
    %68 = math.cos %65 : vector<8x20xf32>
    %69 = math.sin %65 : vector<8x20xf32>
    %70 = vector.broadcast %66 : vector<1x20xf32> to vector<8x20xf32>
    %71 = arith.mulf %70, %68 : vector<8x20xf32>
    %72 = vector.broadcast %66 : vector<1x20xf32> to vector<8x20xf32>
    %73 = arith.mulf %72, %69 : vector<8x20xf32>
    %74 = vector.broadcast %67 : vector<1x20xf32> to vector<8x20xf32>
    %75 = arith.mulf %74, %68 : vector<8x20xf32>
    %76 = vector.broadcast %67 : vector<1x20xf32> to vector<8x20xf32>
    %77 = arith.mulf %76, %69 : vector<8x20xf32>
    %78 = arith.mulf %63, %63 : vector<8x20xf32>
    %79 = arith.mulf %64, %64 : vector<8x20xf32>
    %80 = arith.mulf %63, %64 : vector<8x20xf32>
    %81 = vector.broadcast %66 : vector<1x20xf32> to vector<8x20xf32>
    %82 = arith.mulf %81, %78 : vector<8x20xf32>
    %83 = arith.addf %71, %77 : vector<8x20xf32>
    %84 = arith.mulf %80, %83 : vector<8x20xf32>
    %85 = arith.subf %82, %84 : vector<8x20xf32>
    %cst_52 = arith.constant 0.000000e+00 : f32
    %86 = vector.broadcast %cst_52 : f32 to vector<1x20xf32>
    %87 = arith.subf %86, %67 : vector<1x20xf32>
    %88 = vector.broadcast %87 : vector<1x20xf32> to vector<8x20xf32>
    %89 = arith.mulf %88, %78 : vector<8x20xf32>
    %90 = arith.subf %73, %75 : vector<8x20xf32>
    %91 = arith.mulf %80, %90 : vector<8x20xf32>
    %92 = arith.subf %89, %91 : vector<8x20xf32>
    %93 = vector.broadcast %66 : vector<1x20xf32> to vector<8x20xf32>
    %94 = arith.mulf %93, %79 : vector<8x20xf32>
    %95 = arith.subf %71, %77 : vector<8x20xf32>
    %96 = arith.mulf %80, %95 : vector<8x20xf32>
    %97 = arith.subf %94, %96 : vector<8x20xf32>
    %cst_53 = arith.constant 0.000000e+00 : f32
    %98 = vector.broadcast %cst_53 : f32 to vector<1x20xf32>
    %99 = arith.subf %98, %67 : vector<1x20xf32>
    %100 = vector.broadcast %99 : vector<1x20xf32> to vector<8x20xf32>
    %101 = arith.mulf %100, %79 : vector<8x20xf32>
    %102 = arith.addf %73, %75 : vector<8x20xf32>
    %103 = arith.mulf %80, %102 : vector<8x20xf32>
    %104 = arith.addf %101, %103 : vector<8x20xf32>
    %cst_54 = arith.constant 0.000000e+00 : f32
    %105 = vector.broadcast %cst_54 : f32 to vector<8x100xf32>
    %106 = tpu.concatenate %54, %58, %85, %92, %97, %104, %105 in 1 : vector<8x44xf32>, vector<8x32xf32>, vector<8x20xf32>, vector<8x20xf32>, vector<8x20xf32>, vector<8x20xf32>, vector<8x100xf32> -> vector<8x256xf32>
    %c0_55 = arith.constant 0 : index
    %c0_56 = arith.constant 0 : index
    %107 = vector.load %arg18[%c0_55, %c0_56] : memref<8x256xf32, #tpu.memory_space<vmem>>, vector<8x256xf32>
    tpu.vector_store %arg18[%c0_55, %c0_56], %106 {strides = array<i32>} : memref<8x256xf32, #tpu.memory_space<vmem>>, vector<8x256xf32>,
    return
  }
  func.func @transform_0(%arg0: i32) -> (i32, i32) {
    %c0_i32 = arith.constant 0 : i32
    %c0_i32_0 = arith.constant 0 : i32
    return %arg0, %c0_i32 : i32, i32
  }
  func.func @transform_1(%arg0: i32) -> (i32, i32) {
    %c0_i32 = arith.constant 0 : i32
    %c0_i32_0 = arith.constant 0 : i32
    %c0_i32_1 = arith.constant 0 : i32
    return %c0_i32, %c0_i32_0 : i32, i32
  }
  func.func @transform_2(%arg0: i32) -> (i32, i32) {
    %c0_i32 = arith.constant 0 : i32
    %c0_i32_0 = arith.constant 0 : i32
    %c0_i32_1 = arith.constant 0 : i32
    return %c0_i32, %c0_i32_0 : i32, i32
  }
  func.func @transform_3(%arg0: i32) -> (i32, i32) {
    %c0_i32 = arith.constant 0 : i32
    %c0_i32_0 = arith.constant 0 : i32
    %c0_i32_1 = arith.constant 0 : i32
    return %c0_i32, %c0_i32_0 : i32, i32
  }
  func.func @transform_4(%arg0: i32) -> (i32, i32) {
    %c0_i32 = arith.constant 0 : i32
    %c0_i32_0 = arith.constant 0 : i32
    %c0_i32_1 = arith.constant 0 : i32
    return %c0_i32, %c0_i32_0 : i32, i32
  }
  func.func @transform_5(%arg0: i32) -> (i32, i32) {
    %c0_i32 = arith.constant 0 : i32
    %c0_i32_0 = arith.constant 0 : i32
    %c0_i32_1 = arith.constant 0 : i32
    return %c0_i32, %c0_i32_0 : i32, i32
  }
  func.func @transform_6(%arg0: i32) -> (i32, i32) {
    %c0_i32 = arith.constant 0 : i32
    %c0_i32_0 = arith.constant 0 : i32
    %c0_i32_1 = arith.constant 0 : i32
    return %c0_i32, %c0_i32_0 : i32, i32
  }
  func.func @transform_7(%arg0: i32) -> (i32, i32) {
    %c0_i32 = arith.constant 0 : i32
    %c0_i32_0 = arith.constant 0 : i32
    %c0_i32_1 = arith.constant 0 : i32
    return %c0_i32, %c0_i32_0 : i32, i32
  }
  func.func @transform_8(%arg0: i32) -> (i32, i32) {
    %c0_i32 = arith.constant 0 : i32
    %c0_i32_0 = arith.constant 0 : i32
    %c0_i32_1 = arith.constant 0 : i32
    return %c0_i32, %c0_i32_0 : i32, i32
  }
  func.func @transform_9(%arg0: i32) -> (i32, i32) {
    %c0_i32 = arith.constant 0 : i32
    %c0_i32_0 = arith.constant 0 : i32
    %c0_i32_1 = arith.constant 0 : i32
    return %c0_i32, %c0_i32_0 : i32, i32
  }
  func.func @transform_10(%arg0: i32) -> (i32, i32) {
    %c0_i32 = arith.constant 0 : i32
    %c0_i32_0 = arith.constant 0 : i32
    %c0_i32_1 = arith.constant 0 : i32
    return %c0_i32, %c0_i32_0 : i32, i32
  }
  func.func @transform_11(%arg0: i32) -> (i32, i32) {
    %c0_i32 = arith.constant 0 : i32
    %c0_i32_0 = arith.constant 0 : i32
    %c0_i32_1 = arith.constant 0 : i32
    return %c0_i32, %c0_i32_0 : i32, i32
  }
  func.func @transform_12(%arg0: i32) -> (i32, i32) {
    %c0_i32 = arith.constant 0 : i32
    %c0_i32_0 = arith.constant 0 : i32
    %c0_i32_1 = arith.constant 0 : i32
    return %c0_i32, %c0_i32_0 : i32, i32
  }
  func.func @transform_13(%arg0: i32) -> (i32, i32) {
    %c0_i32 = arith.constant 0 : i32
    %c0_i32_0 = arith.constant 0 : i32
    %c0_i32_1 = arith.constant 0 : i32
    return %c0_i32, %c0_i32_0 : i32, i32
  }
  func.func @transform_14(%arg0: i32) -> (i32, i32) {
    %c0_i32 = arith.constant 0 : i32
    %c0_i32_0 = arith.constant 0 : i32
    %c0_i32_1 = arith.constant 0 : i32
    return %c0_i32, %c0_i32_0 : i32, i32
  }
  func.func @transform_15(%arg0: i32) -> (i32, i32) {
    %c0_i32 = arith.constant 0 : i32
    %c0_i32_0 = arith.constant 0 : i32
    %c0_i32_1 = arith.constant 0 : i32
    return %c0_i32, %c0_i32_0 : i32, i32
  }
  func.func @transform_16(%arg0: i32) -> (i32, i32) {
    %c0_i32 = arith.constant 0 : i32
    %c0_i32_0 = arith.constant 0 : i32
    %c0_i32_1 = arith.constant 0 : i32
    return %c0_i32, %c0_i32_0 : i32, i32
  }
  func.func @transform_17(%arg0: i32) -> (i32, i32) {
    %c0_i32 = arith.constant 0 : i32
    %c0_i32_0 = arith.constant 0 : i32
    return %arg0, %c0_i32 : i32, i32
  }
}

</mosaic_0001>

<llo_original>
// kernel: _lambda_.1
$region0: #{_lambda_.1}
  #allocation0 [shape = 'u32[]', space=smem, size = 0x4, offset = 0x4, fixed_abs, tag = 'smem constant byte address 0x4 - core index']
  #allocation1 [shape = 'u32[72,128]{1,0:T(1,128)}', space=vmem, size = 0x9000, scoped, tag = 'internal scratch']
  %s0 = inlined_call_operand.vmem [shape: f32[16,6], index: 0, kind: input, shape index: {}]
  %s1 = inlined_call_operand.hbm [shape: f32[6,16], index: 1, kind: input, shape index: {}]
  %s2 = inlined_call_operand.hbm [shape: f32[1,16], index: 2, kind: input, shape index: {}]
  %s3 = inlined_call_operand.hbm [shape: f32[16,16], index: 3, kind: input, shape index: {}]
  %s4 = inlined_call_operand.hbm [shape: f32[1,16], index: 4, kind: input, shape index: {}]
  %s5 = inlined_call_operand.vmem [shape: f32[16,44], index: 5, kind: input, shape index: {}]
  %s6 = inlined_call_operand.hbm [shape: f32[1,44], index: 6, kind: input, shape index: {}]
  %s7 = inlined_call_operand.hbm [shape: f32[44,44], index: 7, kind: input, shape index: {}]
  %s8 = inlined_call_operand.hbm [shape: f32[1,44], index: 8, kind: input, shape index: {}]
  %s9 = inlined_call_operand.hbm [shape: f32[44,44], index: 9, kind: input, shape index: {}]
  %s10 = inlined_call_operand.hbm [shape: f32[1,44], index: 10, kind: input, shape index: {}]
  %s11 = inlined_call_operand.hbm [shape: f32[44,44], index: 11, kind: input, shape index: {}]
  %s12 = inlined_call_operand.hbm [shape: f32[1,44], index: 12, kind: input, shape index: {}]
  %s13 = inlined_call_operand.hbm [shape: f32[2,44], index: 13, kind: input, shape index: {}]
  %s14 = inlined_call_operand.vmem [shape: bf16[8,32], index: 14, kind: input, shape index: {}]
  %s15 = inlined_call_operand.vmem [shape: bf16[16,40], index: 15, kind: input, shape index: {}]
  %s16 = inlined_call_operand.vmem [shape: f32[2,20], index: 16, kind: input, shape index: {}]
  %s17 = inlined_call_operand.vmem [shape: f32[16,256], index: 17, kind: output, shape index: {}]
  %s18 = sld [smem:[#allocation0]]
  $region149: #{_lambda_.1} parent=0
    _
  %s20 = ssub.s32 1, %s18
  %s21 = scalar_select 0, %s20, %s18
  $region1: #{_lambda_.1} parent=0
    #allocation2 [shape = 'u8[4096]{0}', space=vmem, size = 0x1000, scoped, tag = 'input window, operand 1, single buffered']
    #allocation3 [shape = 's32[2]{0}', space=sflag, size = 0x8, scoped, tag = 'scoped memory for _lambda_.1']
    #allocation4 [shape = 'u8[512]{0}', space=vmem, size = 0x400, scoped, tag = 'input window, operand 2, single buffered']
    #allocation5 [shape = 's32[1]{0}', space=sflag, size = 0x4, scoped, tag = 'scoped memory for _lambda_.1']
    #allocation6 [shape = 'u8[8192]{0}', space=vmem, size = 0x2000, scoped, tag = 'input window, operand 3, single buffered']
    #allocation7 [shape = 'u8[512]{0}', space=vmem, size = 0x400, scoped, tag = 'input window, operand 4, single buffered']
    #allocation8 [shape = 's32[1]{0}', space=sflag, size = 0x4, scoped, tag = 'scoped memory for _lambda_.1']
    #allocation9 [shape = 'u8[512]{0}', space=vmem, size = 0x400, scoped, tag = 'input window, operand 6, single buffered']
    #allocation10 [shape = 'u8[24576]{0}', space=vmem, size = 0x6000, scoped, tag = 'input window, operand 7, single buffered']
    #allocation11 [shape = 's32[1]{0}', space=sflag, size = 0x4, scoped, tag = 'scoped memory for _lambda_.1']
    #allocation12 [shape = 'u8[512]{0}', space=vmem, size = 0x400, scoped, tag = 'input window, operand 8, single buffered']
    #allocation13 [shape = 'u8[24576]{0}', space=vmem, size = 0x6000, scoped, tag = 'input window, operand 9, single buffered']
    #allocation14 [shape = 's32[1]{0}', space=sflag, size = 0x4, scoped, tag = 'scoped memory for _lambda_.1']
    #allocation15 [shape = 'u8[512]{0}', space=vmem, size = 0x400, scoped, tag = 'input window, operand 10, single buffered']
    #allocation16 [shape = 'u8[24576]{0}', space=vmem, size = 0x6000, scoped, tag = 'input window, operand 11, single buffered']
    #allocation17 [shape = 's32[1]{0}', space=sflag, size = 0x4, scoped, tag = 'scoped memory for _lambda_.1']
    #allocation18 [shape = 'u8[512]{0}', space=vmem, size = 0x400, scoped, tag = 'input window, operand 12, single buffered']
    #allocation19 [shape = 'u8[1024]{0}', space=vmem, size = 0x400, scoped, tag = 'input window, operand 13, single buffered']
    #allocation20 [shape = 's32[1]{0}', space=sflag, size = 0x4, scoped, tag = 'scoped memory for _lambda_.1']
    %22 = vsyncpa [#allocation3], 0
    %23 = vsyncpa [#allocation5], 0
    %24 = vsyncpa [#allocation8], 0
    %25 = vsyncpa [#allocation11], 0
    %26 = vsyncpa [#allocation14], 0
    %27 = vsyncpa [#allocation17], 0
    %28 = vsyncpa [#allocation20], 0
    loop: start=0, step=1, limit=4
    $region2: #{_lambda_.1} parent=1 // loop_pre_header
      _
    $region3: #{_lambda_.1} parent=1 // loop_header
      %s30 = sphi 0, %s34
      %p31 = scmp.ge.s32.totalorder %s30, 4
      %s40 = sphi 0, %s42
      %s43 = sphi 0, %s40
      %s44 = sphi 0, %s43
      %s60 = sphi 0, %s44
      %s64 = sphi 0, %s64
      %s66 = sphi 0, %s64
      %s67 = sphi 0, %s66
      %s81 = sphi 0, %s67
      %s85 = sphi 0, %s85
      %s87 = sphi 0, %s85
      %s88 = sphi 0, %s87
      %s102 = sphi 0, %s88
      %s106 = sphi 0, %s106
      %s108 = sphi 0, %s106
      %s109 = sphi 0, %s108
      %s123 = sphi 0, %s109
      %s127 = sphi 0, %s127
      %s129 = sphi 0, %s127
      %s130 = sphi 0, %s129
      %s144 = sphi 0, %s130
      %s148 = sphi 0, %s148
      %s150 = sphi 0, %s148
      %s151 = sphi 0, %s150
      %s165 = sphi 0, %s151
      %s169 = sphi 0, %s169
      %s171 = sphi 0, %s169
      %s172 = sphi 0, %s171
      %s186 = sphi 0, %s172
      %s190 = sphi 0, %s190
      %s192 = sphi 0, %s190
      %s193 = sphi 0, %s192
      %s207 = sphi 0, %s193
      %s211 = sphi 0, %s211
      %s213 = sphi 0, %s211
      %s214 = sphi 0, %s213
      %s228 = sphi 0, %s214
      %s232 = sphi 0, %s232
      %s234 = sphi 0, %s232
      %s235 = sphi 0, %s234
      %s249 = sphi 0, %s235
      %s253 = sphi 0, %s253
      %s255 = sphi 0, %s253
      %s256 = sphi 0, %s255
      %s270 = sphi 0, %s256
      %s274 = sphi 0, %s274
      %s276 = sphi 0, %s274
      %s277 = sphi 0, %s276
      %s291 = sphi 0, %s277
      %s295 = sphi 0, %s295
      %s297 = sphi 0, %s295
      %s298 = sphi 0, %s297
      %s312 = sphi 0, %s298
      %s316 = sphi 0, %s316
      %s318 = sphi 0, %s316
      %s319 = sphi 0, %s318
      %s333 = sphi 0, %s319
      %s337 = sphi 0, %s337
      %s339 = sphi 0, %s337
      %s340 = sphi 0, %s339
      %s354 = sphi 0, %s340
      %s358 = sphi 0, %s358
      %s360 = sphi 0, %s358
      %s361 = sphi 0, %s360
      %s375 = sphi 0, %s361
      %s379 = sphi 0, %s379
      %s381 = sphi 0, %s379
      %s382 = sphi 0, %s381
      %s396 = sphi 0, %s382
      %s402 = sphi 0, %s404
      %s405 = sphi 0, %s402
      %s406 = sphi 0, %s405
      %s422 = sphi 0, %s406
    $region4: #{_lambda_.1} parent=1 // loop_header_branch
      %33 = sbr.rel (%p31) target = $region8
    $region5: #{_lambda_.1} parent=1 // loop_body
      %s35 = ssub.s32 %s30, 1
      %s36 = ssub.s32 %s30, 2
      %s37 = sadd.s32 %s30, 1
      %s38 = ssub.s32 %s30, %s37
      %p39 = scmp.eq.s32.totalorder %s38, 0
      %s41 = sadd.s32 %s40, 1
      %s42 = scalar_select %p39, %s40, %s41
      %p45 = pneg %p39
      %p46 = scmp.eq.s32.totalorder %s30, 1
      %p47 = por %p45, %p46
      %p48 = scmp.ne.s32.totalorder %s40, %s43
      %p49 = scmp.eq.s32.totalorder %s30, 0
      %p50 = por %p48, %p49
      %p51 = scmp.ne.s32.totalorder %s40, %s43
      %p52 = scmp.eq.s32.totalorder %s35, 1
      %p53 = por %p51, %p52
      %p54 = scmp.ne.s32.totalorder %s43, %s44
      %p55 = scmp.eq.s32.totalorder %s35, 0
      %p56 = por %p54, %p55
      %p57 = scmp.ne.s32.totalorder %s43, %s44
      %p58 = scmp.eq.s32.totalorder %s36, 1
      %p59 = por %p57, %p58
      %p61 = scmp.ne.s32.totalorder %s44, %s60
      %p62 = scmp.eq.s32.totalorder %s36, 0
      %p63 = por %p61, %p62
      %s65 = sadd.s32 %s64, 1
      %p68 = scmp.eq.s32.totalorder %s30, 1
      %p69 = scmp.ne.s32.totalorder %s64, %s66
      %p70 = scmp.eq.s32.totalorder %s30, 0
      %p71 = por %p69, %p70
      %p72 = scmp.ne.s32.totalorder %s64, %s66
      %p73 = scmp.eq.s32.totalorder %s35, 1
      %p74 = por %p72, %p73
      %p75 = scmp.ne.s32.totalorder %s66, %s67
      %p76 = scmp.eq.s32.totalorder %s35, 0
      %p77 = por %p75, %p76
      %p78 = scmp.ne.s32.totalorder %s66, %s67
      %p79 = scmp.eq.s32.totalorder %s36, 1
      %p80 = por %p78, %p79
      %p82 = scmp.ne.s32.totalorder %s67, %s81
      %p83 = scmp.eq.s32.totalorder %s36, 0
      %p84 = por %p82, %p83
      %s86 = sadd.s32 %s85, 1
      %p89 = scmp.eq.s32.totalorder %s30, 1
      %p90 = scmp.ne.s32.totalorder %s85, %s87
      %p91 = scmp.eq.s32.totalorder %s30, 0
      %p92 = por %p90, %p91
      %p93 = scmp.ne.s32.totalorder %s85, %s87
      %p94 = scmp.eq.s32.totalorder %s35, 1
      %p95 = por %p93, %p94
      %p96 = scmp.ne.s32.totalorder %s87, %s88
      %p97 = scmp.eq.s32.totalorder %s35, 0
      %p98 = por %p96, %p97
      %p99 = scmp.ne.s32.totalorder %s87, %s88
      %p100 = scmp.eq.s32.totalorder %s36, 1
      %p101 = por %p99, %p100
      %p103 = scmp.ne.s32.totalorder %s88, %s102
      %p104 = scmp.eq.s32.totalorder %s36, 0
      %p105 = por %p103, %p104
      %s107 = sadd.s32 %s106, 1
      %p110 = scmp.eq.s32.totalorder %s30, 1
      %p111 = scmp.ne.s32.totalorder %s106, %s108
      %p112 = scmp.eq.s32.totalorder %s30, 0
      %p113 = por %p111, %p112
      %p114 = scmp.ne.s32.totalorder %s106, %s108
      %p115 = scmp.eq.s32.totalorder %s35, 1
      %p116 = por %p114, %p115
      %p117 = scmp.ne.s32.totalorder %s108, %s109
      %p118 = scmp.eq.s32.totalorder %s35, 0
      %p119 = por %p117, %p118
      %p120 = scmp.ne.s32.totalorder %s108, %s109
      %p121 = scmp.eq.s32.totalorder %s36, 1
      %p122 = por %p120, %p121
      %p124 = scmp.ne.s32.totalorder %s109, %s123
      %p125 = scmp.eq.s32.totalorder %s36, 0
      %p126 = por %p124, %p125
      %s128 = sadd.s32 %s127, 1
      %p131 = scmp.eq.s32.totalorder %s30, 1
      %p132 = scmp.ne.s32.totalorder %s127, %s129
      %p133 = scmp.eq.s32.totalorder %s30, 0
      %p134 = por %p132, %p133
      %p135 = scmp.ne.s32.totalorder %s127, %s129
      %p136 = scmp.eq.s32.totalorder %s35, 1
      %p137 = por %p135, %p136
      %p138 = scmp.ne.s32.totalorder %s129, %s130
      %p139 = scmp.eq.s32.totalorder %s35, 0
      %p140 = por %p138, %p139
      %p141 = scmp.ne.s32.totalorder %s129, %s130
      %p142 = scmp.eq.s32.totalorder %s36, 1
      %p143 = por %p141, %p142
      %p145 = scmp.ne.s32.totalorder %s130, %s144
      %p146 = scmp.eq.s32.totalorder %s36, 0
      %p147 = por %p145, %p146
      %s149 = sadd.s32 %s148, 1
      %p152 = scmp.eq.s32.totalorder %s30, 1
      %p153 = scmp.ne.s32.totalorder %s148, %s150
      %p154 = scmp.eq.s32.totalorder %s30, 0
      %p155 = por %p153, %p154
      %p156 = scmp.ne.s32.totalorder %s148, %s150
      %p157 = scmp.eq.s32.totalorder %s35, 1
      %p158 = por %p156, %p157
      %p159 = scmp.ne.s32.totalorder %s150, %s151
      %p160 = scmp.eq.s32.totalorder %s35, 0
      %p161 = por %p159, %p160
      %p162 = scmp.ne.s32.totalorder %s150, %s151
      %p163 = scmp.eq.s32.totalorder %s36, 1
      %p164 = por %p162, %p163
      %p166 = scmp.ne.s32.totalorder %s151, %s165
      %p167 = scmp.eq.s32.totalorder %s36, 0
      %p168 = por %p166, %p167
      %s170 = sadd.s32 %s169, 1
      %p173 = scmp.eq.s32.totalorder %s30, 1
      %p174 = scmp.ne.s32.totalorder %s169, %s171
      %p175 = scmp.eq.s32.totalorder %s30, 0
      %p176 = por %p174, %p175
      %p177 = scmp.ne.s32.totalorder %s169, %s171
      %p178 = scmp.eq.s32.totalorder %s35, 1
      %p179 = por %p177, %p178
      %p180 = scmp.ne.s32.totalorder %s171, %s172
      %p181 = scmp.eq.s32.totalorder %s35, 0
      %p182 = por %p180, %p181
      %p183 = scmp.ne.s32.totalorder %s171, %s172
      %p184 = scmp.eq.s32.totalorder %s36, 1
      %p185 = por %p183, %p184
      %p187 = scmp.ne.s32.totalorder %s172, %s186
      %p188 = scmp.eq.s32.totalorder %s36, 0
      %p189 = por %p187, %p188
      %s191 = sadd.s32 %s190, 1
      %p194 = scmp.eq.s32.totalorder %s30, 1
      %p195 = scmp.ne.s32.totalorder %s190, %s192
      %p196 = scmp.eq.s32.totalorder %s30, 0
      %p197 = por %p195, %p196
      %p198 = scmp.ne.s32.totalorder %s190, %s192
      %p199 = scmp.eq.s32.totalorder %s35, 1
      %p200 = por %p198, %p199
      %p201 = scmp.ne.s32.totalorder %s192, %s193
      %p202 = scmp.eq.s32.totalorder %s35, 0
      %p203 = por %p201, %p202
      %p204 = scmp.ne.s32.totalorder %s192, %s193
      %p205 = scmp.eq.s32.totalorder %s36, 1
      %p206 = por %p204, %p205
      %p208 = scmp.ne.s32.totalorder %s193, %s207
      %p209 = scmp.eq.s32.totalorder %s36, 0
      %p210 = por %p208, %p209
      %s212 = sadd.s32 %s211, 1
      %p215 = scmp.eq.s32.totalorder %s30, 1
      %p216 = scmp.ne.s32.totalorder %s211, %s213
      %p217 = scmp.eq.s32.totalorder %s30, 0
      %p218 = por %p216, %p217
      %p219 = scmp.ne.s32.totalorder %s211, %s213
      %p220 = scmp.eq.s32.totalorder %s35, 1
      %p221 = por %p219, %p220
      %p222 = scmp.ne.s32.totalorder %s213, %s214
      %p223 = scmp.eq.s32.totalorder %s35, 0
      %p224 = por %p222, %p223
      %p225 = scmp.ne.s32.totalorder %s213, %s214
      %p226 = scmp.eq.s32.totalorder %s36, 1
      %p227 = por %p225, %p226
      %p229 = scmp.ne.s32.totalorder %s214, %s228
      %p230 = scmp.eq.s32.totalorder %s36, 0
      %p231 = por %p229, %p230
      %s233 = sadd.s32 %s232, 1
      %p236 = scmp.eq.s32.totalorder %s30, 1
      %p237 = scmp.ne.s32.totalorder %s232, %s234
      %p238 = scmp.eq.s32.totalorder %s30, 0
      %p239 = por %p237, %p238
      %p240 = scmp.ne.s32.totalorder %s232, %s234
      %p241 = scmp.eq.s32.totalorder %s35, 1
      %p242 = por %p240, %p241
      %p243 = scmp.ne.s32.totalorder %s234, %s235
      %p244 = scmp.eq.s32.totalorder %s35, 0
      %p245 = por %p243, %p244
      %p246 = scmp.ne.s32.totalorder %s234, %s235
      %p247 = scmp.eq.s32.totalorder %s36, 1
      %p248 = por %p246, %p247
      %p250 = scmp.ne.s32.totalorder %s235, %s249
      %p251 = scmp.eq.s32.totalorder %s36, 0
      %p252 = por %p250, %p251
      %s254 = sadd.s32 %s253, 1
      %p257 = scmp.eq.s32.totalorder %s30, 1
      %p258 = scmp.ne.s32.totalorder %s253, %s255
      %p259 = scmp.eq.s32.totalorder %s30, 0
      %p260 = por %p258, %p259
      %p261 = scmp.ne.s32.totalorder %s253, %s255
      %p262 = scmp.eq.s32.totalorder %s35, 1
      %p263 = por %p261, %p262
      %p264 = scmp.ne.s32.totalorder %s255, %s256
      %p265 = scmp.eq.s32.totalorder %s35, 0
      %p266 = por %p264, %p265
      %p267 = scmp.ne.s32.totalorder %s255, %s256
      %p268 = scmp.eq.s32.totalorder %s36, 1
      %p269 = por %p267, %p268
      %p271 = scmp.ne.s32.totalorder %s256, %s270
      %p272 = scmp.eq.s32.totalorder %s36, 0
      %p273 = por %p271, %p272
      %s275 = sadd.s32 %s274, 1
      %p278 = scmp.eq.s32.totalorder %s30, 1
      %p279 = scmp.ne.s32.totalorder %s274, %s276
      %p280 = scmp.eq.s32.totalorder %s30, 0
      %p281 = por %p279, %p280
      %p282 = scmp.ne.s32.totalorder %s274, %s276
      %p283 = scmp.eq.s32.totalorder %s35, 1
      %p284 = por %p282, %p283
      %p285 = scmp.ne.s32.totalorder %s276, %s277
      %p286 = scmp.eq.s32.totalorder %s35, 0
      %p287 = por %p285, %p286
      %p288 = scmp.ne.s32.totalorder %s276, %s277
      %p289 = scmp.eq.s32.totalorder %s36, 1
      %p290 = por %p288, %p289
      %p292 = scmp.ne.s32.totalorder %s277, %s291
      %p293 = scmp.eq.s32.totalorder %s36, 0
      %p294 = por %p292, %p293
      %s296 = sadd.s32 %s295, 1
      %p299 = scmp.eq.s32.totalorder %s30, 1
      %p300 = scmp.ne.s32.totalorder %s295, %s297
      %p301 = scmp.eq.s32.totalorder %s30, 0
      %p302 = por %p300, %p301
      %p303 = scmp.ne.s32.totalorder %s295, %s297
      %p304 = scmp.eq.s32.totalorder %s35, 1
      %p305 = por %p303, %p304
      %p306 = scmp.ne.s32.totalorder %s297, %s298
      %p307 = scmp.eq.s32.totalorder %s35, 0
      %p308 = por %p306, %p307
      %p309 = scmp.ne.s32.totalorder %s297, %s298
      %p310 = scmp.eq.s32.totalorder %s36, 1
      %p311 = por %p309, %p310
      %p313 = scmp.ne.s32.totalorder %s298, %s312
      %p314 = scmp.eq.s32.totalorder %s36, 0
      %p315 = por %p313, %p314
      %s317 = sadd.s32 %s316, 1
      %p320 = scmp.eq.s32.totalorder %s30, 1
      %p321 = scmp.ne.s32.totalorder %s316, %s318
      %p322 = scmp.eq.s32.totalorder %s30, 0
      %p323 = por %p321, %p322
      %p324 = scmp.ne.s32.totalorder %s316, %s318
      %p325 = scmp.eq.s32.totalorder %s35, 1
      %p326 = por %p324, %p325
      %p327 = scmp.ne.s32.totalorder %s318, %s319
      %p328 = scmp.eq.s32.totalorder %s35, 0
      %p329 = por %p327, %p328
      %p330 = scmp.ne.s32.totalorder %s318, %s319
      %p331 = scmp.eq.s32.totalorder %s36, 1
      %p332 = por %p330, %p331
      %p334 = scmp.ne.s32.totalorder %s319, %s333
      %p335 = scmp.eq.s32.totalorder %s36, 0
      %p336 = por %p334, %p335
      %s338 = sadd.s32 %s337, 1
      %p341 = scmp.eq.s32.totalorder %s30, 1
      %p342 = scmp.ne.s32.totalorder %s337, %s339
      %p343 = scmp.eq.s32.totalorder %s30, 0
      %p344 = por %p342, %p343
      %p345 = scmp.ne.s32.totalorder %s337, %s339
      %p346 = scmp.eq.s32.totalorder %s35, 1
      %p347 = por %p345, %p346
      %p348 = scmp.ne.s32.totalorder %s339, %s340
      %p349 = scmp.eq.s32.totalorder %s35, 0
      %p350 = por %p348, %p349
      %p351 = scmp.ne.s32.totalorder %s339, %s340
      %p352 = scmp.eq.s32.totalorder %s36, 1
      %p353 = por %p351, %p352
      %p355 = scmp.ne.s32.totalorder %s340, %s354
      %p356 = scmp.eq.s32.totalorder %s36, 0
      %p357 = por %p355, %p356
      %s359 = sadd.s32 %s358, 1
      %p362 = scmp.eq.s32.totalorder %s30, 1
      %p363 = scmp.ne.s32.totalorder %s358, %s360
      %p364 = scmp.eq.s32.totalorder %s30, 0
      %p365 = por %p363, %p364
      %p366 = scmp.ne.s32.totalorder %s358, %s360
      %p367 = scmp.eq.s32.totalorder %s35, 1
      %p368 = por %p366, %p367
      %p369 = scmp.ne.s32.totalorder %s360, %s361
      %p370 = scmp.eq.s32.totalorder %s35, 0
      %p371 = por %p369, %p370
      %p372 = scmp.ne.s32.totalorder %s360, %s361
      %p373 = scmp.eq.s32.totalorder %s36, 1
      %p374 = por %p372, %p373
      %p376 = scmp.ne.s32.totalorder %s361, %s375
      %p377 = scmp.eq.s32.totalorder %s36, 0
      %p378 = por %p376, %p377
      %s380 = sadd.s32 %s379, 1
      %p383 = scmp.eq.s32.totalorder %s30, 1
      %p384 = scmp.ne.s32.totalorder %s379, %s381
      %p385 = scmp.eq.s32.totalorder %s30, 0
      %p386 = por %p384, %p385
      %p387 = scmp.ne.s32.totalorder %s379, %s381
      %p388 = scmp.eq.s32.totalorder %s35, 1
      %p389 = por %p387, %p388
      %p390 = scmp.ne.s32.totalorder %s381, %s382
      %p391 = scmp.eq.s32.totalorder %s35, 0
      %p392 = por %p390, %p391
      %p393 = scmp.ne.s32.totalorder %s381, %s382
      %p394 = scmp.eq.s32.totalorder %s36, 1
      %p395 = por %p393, %p394
      %p397 = scmp.ne.s32.totalorder %s382, %s396
      %p398 = scmp.eq.s32.totalorder %s36, 0
      %p399 = por %p397, %p398
      %s400 = ssub.s32 %s30, %s37
      %p401 = scmp.eq.s32.totalorder %s400, 0
      %s403 = sadd.s32 %s402, 1
      %s404 = scalar_select %p401, %s402, %s403
      %p407 = pneg %p401
      %p408 = scmp.eq.s32.totalorder %s30, 1
      %p409 = por %p407, %p408
      %p410 = scmp.ne.s32.totalorder %s402, %s405
      %p411 = scmp.eq.s32.totalorder %s30, 0
      %p412 = por %p410, %p411
      %p413 = scmp.ne.s32.totalorder %s402, %s405
      %p414 = scmp.eq.s32.totalorder %s35, 1
      %p415 = por %p413, %p414
      %p416 = scmp.ne.s32.totalorder %s405, %s406
      %p417 = scmp.eq.s32.totalorder %s35, 0
      %p418 = por %p416, %p417
      %p419 = scmp.ne.s32.totalorder %s405, %s406
      %p420 = scmp.eq.s32.totalorder %s36, 1
      %p421 = por %p419, %p420
      %p423 = scmp.ne.s32.totalorder %s406, %s422
      %p424 = scmp.eq.s32.totalorder %s36, 0
      %p425 = por %p423, %p424
      %p426 = scmp.le.s32.totalorder 1, %s30
      %p427 = scmp.lt.s32.totalorder %s30, 3
      %p428 = pnand %p426, %p427
      %p429 = pneg %p428
      // Predicated region
      $region9: #{_lambda_.1} parent=5 // pred_check
        _
      $region10: #{_lambda_.1} parent=5 // pred_check_branch
        %431 = sbr.rel (%p428) target = $region12
      $region11: #{_lambda_.1} parent=5 // pred_region
        %s432 = ssub.s32 %s30, 1
        // Predicated region
        $region13: #{_lambda_.1} parent=11 // pred_check
          %p433 = pneg %p77
        $region14: #{_lambda_.1} parent=11 // pred_check_branch
          %435 = sbr.rel (%p433) target = $region16
        $region15: #{_lambda_.1} parent=11 // pred_region
          %437 = vsyncadd [#allocation3], 0
          %s439 = sshll.u32 %s1, 4
          %s440 = int_to_ptr.hbm [resolvable:$true] %s439
          %s441 = sshll.u32 [#allocation2], 4
          %s442 = int_to_ptr.vmem [resolvable:$true] %s441
          %444 = dma.hbm_to_vmem [thread:$0]  %s440, 128, %s442, [#allocation3]
        $region16: #{_lambda_.1} parent=11 // pred_fallthru
          _
        // Predicated region
        $region17: #{_lambda_.1} parent=11 // pred_check
          %p445 = pneg %p98
        $region18: #{_lambda_.1} parent=11 // pred_check_branch
          %447 = sbr.rel (%p445) target = $region20
        $region19: #{_lambda_.1} parent=11 // pred_region
          %449 = vsyncadd [#allocation5], 0
          %s451 = sshll.u32 %s2, 4
          %s452 = int_to_ptr.hbm [resolvable:$true] %s451
          %s453 = sshll.u32 [#allocation4], 4
          %s454 = int_to_ptr.vmem [resolvable:$true] %s453
          %456 = dma.hbm_to_vmem [thread:$0]  %s452, 16, %s454, [#allocation5]
        $region20: #{_lambda_.1} parent=11 // pred_fallthru
          _
        // Predicated region
        $region21: #{_lambda_.1} parent=11 // pred_check
          %p457 = pneg %p119
        $region22: #{_lambda_.1} parent=11 // pred_check_branch
          %459 = sbr.rel (%p457) target = $region24
        $region23: #{_lambda_.1} parent=11 // pred_region
          %461 = vsyncadd [#allocation5], 0
          %s462 = sshll.u32 %s3, 4
          %s463 = int_to_ptr.hbm [resolvable:$true] %s462
          %s464 = sshll.u32 [#allocation6], 4
          %s465 = int_to_ptr.vmem [resolvable:$true] %s464
          %470 = dma.hbm_to_vmem [thread:$0]  %s463, 256, %s465, [#allocation5], 128, 128, 8
        $region24: #{_lambda_.1} parent=11 // pred_fallthru
          _
        // Predicated region
        $region25: #{_lambda_.1} parent=11 // pred_check
          %p471 = pneg %p140
        $region26: #{_lambda_.1} parent=11 // pred_check_branch
          %473 = sbr.rel (%p471) target = $region28
        $region27: #{_lambda_.1} parent=11 // pred_region
          %475 = vsyncadd [#allocation8], 0
          %s477 = sshll.u32 %s4, 4
          %s478 = int_to_ptr.hbm [resolvable:$true] %s477
          %s479 = sshll.u32 [#allocation7], 4
          %s480 = int_to_ptr.vmem [resolvable:$true] %s479
          %482 = dma.hbm_to_vmem [thread:$0]  %s478, 16, %s480, [#allocation8]
        $region28: #{_lambda_.1} parent=11 // pred_fallthru
          _
        // Predicated region
        $region29: #{_lambda_.1} parent=11 // pred_check
          %p483 = pneg %p161
        $region30: #{_lambda_.1} parent=11 // pred_check_branch
          %485 = sbr.rel (%p483) target = $region32
        $region31: #{_lambda_.1} parent=11 // pred_region
          _
        $region32: #{_lambda_.1} parent=11 // pred_fallthru
          _
        // Predicated region
        $region33: #{_lambda_.1} parent=11 // pred_check
          %p486 = pneg %p182
        $region34: #{_lambda_.1} parent=11 // pred_check_branch
          %488 = sbr.rel (%p486) target = $region36
        $region35: #{_lambda_.1} parent=11 // pred_region
          %490 = vsyncadd [#allocation8], 0
          %s492 = sshll.u32 %s6, 4
          %s493 = int_to_ptr.hbm [resolvable:$true] %s492
          %s494 = sshll.u32 [#allocation9], 4
          %s495 = int_to_ptr.vmem [resolvable:$true] %s494
          %497 = dma.hbm_to_vmem [thread:$0]  %s493, 16, %s495, [#allocation8]
        $region36: #{_lambda_.1} parent=11 // pred_fallthru
          _
        // Predicated region
        $region37: #{_lambda_.1} parent=11 // pred_check
          %p498 = pneg %p203
        $region38: #{_lambda_.1} parent=11 // pred_check_branch
          %500 = sbr.rel (%p498) target = $region40
        $region39: #{_lambda_.1} parent=11 // pred_region
          %502 = vsyncadd [#allocation11], 0
          %s503 = sshll.u32 %s7, 4
          %s504 = int_to_ptr.hbm [resolvable:$true] %s503
          %s505 = sshll.u32 [#allocation10], 4
          %s506 = int_to_ptr.vmem [resolvable:$true] %s505
          %511 = dma.hbm_to_vmem [thread:$0]  %s504, 768, %s506, [#allocation11], 128, 128, 8
        $region40: #{_lambda_.1} parent=11 // pred_fallthru
          _
        // Predicated region
        $region41: #{_lambda_.1} parent=11 // pred_check
          %p512 = pneg %p224
        $region42: #{_lambda_.1} parent=11 // pred_check_branch
          %514 = sbr.rel (%p512) target = $region44
        $region43: #{_lambda_.1} parent=11 // pred_region
          %516 = vsyncadd [#allocation11], 0
          %s518 = sshll.u32 %s8, 4
          %s519 = int_to_ptr.hbm [resolvable:$true] %s518
          %s520 = sshll.u32 [#allocation12], 4
          %s521 = int_to_ptr.vmem [resolvable:$true] %s520
          %523 = dma.hbm_to_vmem [thread:$0]  %s519, 16, %s521, [#allocation11]
        $region44: #{_lambda_.1} parent=11 // pred_fallthru
          _
        // Predicated region
        $region45: #{_lambda_.1} parent=11 // pred_check
          %p524 = pneg %p245
        $region46: #{_lambda_.1} parent=11 // pred_check_branch
          %526 = sbr.rel (%p524) target = $region48
        $region47: #{_lambda_.1} parent=11 // pred_region
          %528 = vsyncadd [#allocation14], 0
          %s529 = sshll.u32 %s9, 4
          %s530 = int_to_ptr.hbm [resolvable:$true] %s529
          %s531 = sshll.u32 [#allocation13], 4
          %s532 = int_to_ptr.vmem [resolvable:$true] %s531
          %537 = dma.hbm_to_vmem [thread:$0]  %s530, 768, %s532, [#allocation14], 128, 128, 8
        $region48: #{_lambda_.1} parent=11 // pred_fallthru
          _
        // Predicated region
        $region49: #{_lambda_.1} parent=11 // pred_check
          %p538 = pneg %p266
        $region50: #{_lambda_.1} parent=11 // pred_check_branch
          %540 = sbr.rel (%p538) target = $region52
        $region51: #{_lambda_.1} parent=11 // pred_region
          %542 = vsyncadd [#allocation14], 0
          %s544 = sshll.u32 %s10, 4
          %s545 = int_to_ptr.hbm [resolvable:$true] %s544
          %s546 = sshll.u32 [#allocation15], 4
          %s547 = int_to_ptr.vmem [resolvable:$true] %s546
          %549 = dma.hbm_to_vmem [thread:$0]  %s545, 16, %s547, [#allocation14]
        $region52: #{_lambda_.1} parent=11 // pred_fallthru
          _
        // Predicated region
        $region53: #{_lambda_.1} parent=11 // pred_check
          %p550 = pneg %p287
        $region54: #{_lambda_.1} parent=11 // pred_check_branch
          %552 = sbr.rel (%p550) target = $region56
        $region55: #{_lambda_.1} parent=11 // pred_region
          %554 = vsyncadd [#allocation17], 0
          %s555 = sshll.u32 %s11, 4
          %s556 = int_to_ptr.hbm [resolvable:$true] %s555
          %s557 = sshll.u32 [#allocation16], 4
          %s558 = int_to_ptr.vmem [resolvable:$true] %s557
          %563 = dma.hbm_to_vmem [thread:$0]  %s556, 768, %s558, [#allocation17], 128, 128, 8
        $region56: #{_lambda_.1} parent=11 // pred_fallthru
          _
        // Predicated region
        $region57: #{_lambda_.1} parent=11 // pred_check
          %p564 = pneg %p308
        $region58: #{_lambda_.1} parent=11 // pred_check_branch
          %566 = sbr.rel (%p564) target = $region60
        $region59: #{_lambda_.1} parent=11 // pred_region
          %568 = vsyncadd [#allocation17], 0
          %s570 = sshll.u32 %s12, 4
          %s571 = int_to_ptr.hbm [resolvable:$true] %s570
          %s572 = sshll.u32 [#allocation18], 4
          %s573 = int_to_ptr.vmem [resolvable:$true] %s572
          %575 = dma.hbm_to_vmem [thread:$0]  %s571, 16, %s573, [#allocation17]
        $region60: #{_lambda_.1} parent=11 // pred_fallthru
          _
        // Predicated region
        $region61: #{_lambda_.1} parent=11 // pred_check
          %p576 = pneg %p329
        $region62: #{_lambda_.1} parent=11 // pred_check_branch
          %578 = sbr.rel (%p576) target = $region64
        $region63: #{_lambda_.1} parent=11 // pred_region
          %580 = vsyncadd [#allocation20], 0
          %s582 = sshll.u32 %s13, 4
          %s583 = int_to_ptr.hbm [resolvable:$true] %s582
          %s584 = sshll.u32 [#allocation19], 4
          %s585 = int_to_ptr.vmem [resolvable:$true] %s584
          %587 = dma.hbm_to_vmem [thread:$0]  %s583, 32, %s585, [#allocation20]
        $region64: #{_lambda_.1} parent=11 // pred_fallthru
          _
        // Predicated region
        $region65: #{_lambda_.1} parent=11 // pred_check
          %p588 = pneg %p350
        $region66: #{_lambda_.1} parent=11 // pred_check_branch
          %590 = sbr.rel (%p588) target = $region68
        $region67: #{_lambda_.1} parent=11 // pred_region
          _
        $region68: #{_lambda_.1} parent=11 // pred_fallthru
          _
        // Predicated region
        $region69: #{_lambda_.1} parent=11 // pred_check
          %p591 = pneg %p371
        $region70: #{_lambda_.1} parent=11 // pred_check_branch
          %593 = sbr.rel (%p591) target = $region72
        $region71: #{_lambda_.1} parent=11 // pred_region
          _
        $region72: #{_lambda_.1} parent=11 // pred_fallthru
          _
        // Predicated region
        $region73: #{_lambda_.1} parent=11 // pred_check
          %p594 = pneg %p392
        $region74: #{_lambda_.1} parent=11 // pred_check_branch
          %596 = sbr.rel (%p594) target = $region76
        $region75: #{_lambda_.1} parent=11 // pred_region
          _
        $region76: #{_lambda_.1} parent=11 // pred_fallthru
          _
      $region12: #{_lambda_.1} parent=5 // pred_fallthru
        _
      %p597 = scmp.lt.s32.totalorder %s30, 2
      // Predicated region
      $region77: #{_lambda_.1} parent=5 // pred_check
        %p598 = pneg %p597
      $region78: #{_lambda_.1} parent=5 // pred_check_branch
        %600 = sbr.rel (%p598) target = $region80
      $region79: #{_lambda_.1} parent=5 // pred_region
        // Predicated region
        $region81: #{_lambda_.1} parent=79 // pred_check
          %p601 = pneg %p50
        $region82: #{_lambda_.1} parent=79 // pred_check_branch
          %603 = sbr.rel (%p601) target = $region84
        $region83: #{_lambda_.1} parent=79 // pred_region
          %p604 = scmp.lt.s32.totalorder %s30, 1
          %s605 = scalar_select %p604, %s30, 1
          %s606 = smul.addr %s605, 8
          %s607 = scalar_lea.vmem %s0, %s606
        $region84: #{_lambda_.1} parent=79 // pred_fallthru
          _
      $region80: #{_lambda_.1} parent=5 // pred_fallthru
        _
      %p608 = scmp.le.s32.totalorder 1, %s30
      %p609 = scmp.lt.s32.totalorder %s30, 3
      %p610 = pnand %p608, %p609
      %p611 = pneg %p610
      // Predicated region
      $region85: #{_lambda_.1} parent=5 // pred_check
        _
      $region86: #{_lambda_.1} parent=5 // pred_check_branch
        %613 = sbr.rel (%p610) target = $region88
      $region87: #{_lambda_.1} parent=5 // pred_region
        %s614 = ssub.s32 %s30, 1
        // Predicated region
        $region89: #{_lambda_.1} parent=87 // pred_check
          %p615 = pneg %p77
        $region90: #{_lambda_.1} parent=87 // pred_check_branch
          %617 = sbr.rel (%p615) target = $region92
        $region91: #{_lambda_.1} parent=87 // pred_region
          %619 = dma.done [#allocation3], 128
        $region92: #{_lambda_.1} parent=87 // pred_fallthru
          _
        // Predicated region
        $region93: #{_lambda_.1} parent=87 // pred_check
          %p620 = pneg %p98
        $region94: #{_lambda_.1} parent=87 // pred_check_branch
          %622 = sbr.rel (%p620) target = $region96
        $region95: #{_lambda_.1} parent=87 // pred_region
          %624 = dma.done [#allocation5], 16
        $region96: #{_lambda_.1} parent=87 // pred_fallthru
          _
        // Predicated region
        $region97: #{_lambda_.1} parent=87 // pred_check
          %p625 = pneg %p119
        $region98: #{_lambda_.1} parent=87 // pred_check_branch
          %627 = sbr.rel (%p625) target = $region100
        $region99: #{_lambda_.1} parent=87 // pred_region
          %629 = dma.done [#allocation5], 256
        $region100: #{_lambda_.1} parent=87 // pred_fallthru
          _
        // Predicated region
        $region101: #{_lambda_.1} parent=87 // pred_check
          %p630 = pneg %p140
        $region102: #{_lambda_.1} parent=87 // pred_check_branch
          %632 = sbr.rel (%p630) target = $region104
        $region103: #{_lambda_.1} parent=87 // pred_region
          %634 = dma.done [#allocation8], 16
        $region104: #{_lambda_.1} parent=87 // pred_fallthru
          _
        // Predicated region
        $region105: #{_lambda_.1} parent=87 // pred_check
          %p635 = pneg %p182
        $region106: #{_lambda_.1} parent=87 // pred_check_branch
          %637 = sbr.rel (%p635) target = $region108
        $region107: #{_lambda_.1} parent=87 // pred_region
          %639 = dma.done [#allocation8], 16
        $region108: #{_lambda_.1} parent=87 // pred_fallthru
          _
        // Predicated region
        $region109: #{_lambda_.1} parent=87 // pred_check
          %p640 = pneg %p203
        $region110: #{_lambda_.1} parent=87 // pred_check_branch
          %642 = sbr.rel (%p640) target = $region112
        $region111: #{_lambda_.1} parent=87 // pred_region
          %644 = dma.done [#allocation11], 768
        $region112: #{_lambda_.1} parent=87 // pred_fallthru
          _
        // Predicated region
        $region113: #{_lambda_.1} parent=87 // pred_check
          %p645 = pneg %p224
        $region114: #{_lambda_.1} parent=87 // pred_check_branch
          %647 = sbr.rel (%p645) target = $region116
        $region115: #{_lambda_.1} parent=87 // pred_region
          %649 = dma.done [#allocation11], 16
        $region116: #{_lambda_.1} parent=87 // pred_fallthru
          _
        // Predicated region
        $region117: #{_lambda_.1} parent=87 // pred_check
          %p650 = pneg %p245
        $region118: #{_lambda_.1} parent=87 // pred_check_branch
          %652 = sbr.rel (%p650) target = $region120
        $region119: #{_lambda_.1} parent=87 // pred_region
          %654 = dma.done [#allocation14], 768
        $region120: #{_lambda_.1} parent=87 // pred_fallthru
          _
        // Predicated region
        $region121: #{_lambda_.1} parent=87 // pred_check
          %p655 = pneg %p266
        $region122: #{_lambda_.1} parent=87 // pred_check_branch
          %657 = sbr.rel (%p655) target = $region124
        $region123: #{_lambda_.1} parent=87 // pred_region
          %659 = dma.done [#allocation14], 16
        $region124: #{_lambda_.1} parent=87 // pred_fallthru
          _
        // Predicated region
        $region125: #{_lambda_.1} parent=87 // pred_check
          %p660 = pneg %p287
        $region126: #{_lambda_.1} parent=87 // pred_check_branch
          %662 = sbr.rel (%p660) target = $region128
        $region127: #{_lambda_.1} parent=87 // pred_region
          %664 = dma.done [#allocation17], 768
        $region128: #{_lambda_.1} parent=87 // pred_fallthru
          _
        // Predicated region
        $region129: #{_lambda_.1} parent=87 // pred_check
          %p665 = pneg %p308
        $region130: #{_lambda_.1} parent=87 // pred_check_branch
          %667 = sbr.rel (%p665) target = $region132
        $region131: #{_lambda_.1} parent=87 // pred_region
          %669 = dma.done [#allocation17], 16
        $region132: #{_lambda_.1} parent=87 // pred_fallthru
          _
        // Predicated region
        $region133: #{_lambda_.1} parent=87 // pred_check
          %p670 = pneg %p329
        $region134: #{_lambda_.1} parent=87 // pred_check_branch
          %672 = sbr.rel (%p670) target = $region136
        $region135: #{_lambda_.1} parent=87 // pred_region
          %674 = dma.done [#allocation20], 32
        $region136: #{_lambda_.1} parent=87 // pred_fallthru
          _
        %p675 = scmp.lt.s32.totalorder %s35, 1
        %s676 = scalar_select %p675, %s35, 1
        %s677 = smul.addr %s676, 8
        %s678 = scalar_lea.vmem %s0, %s677
        %p679 = pneg %p56
        %p680 = pneg %p53
        %p681 = pneg %p77
        %p682 = pneg %p74
        %p683 = pneg %p98
        %p684 = pneg %p95
        %p685 = pneg %p119
        %p686 = pneg %p116
        %p687 = pneg %p140
        %p688 = pneg %p137
        %p689 = pneg %p161
        %p690 = pneg %p158
        %p691 = pneg %p182
        %p692 = pneg %p179
        %p693 = pneg %p203
        %p694 = pneg %p200
        %p695 = pneg %p224
        %p696 = pneg %p221
        %p697 = pneg %p245
        %p698 = pneg %p242
        %p699 = pneg %p266
        %p700 = pneg %p263
        %p701 = pneg %p287
        %p702 = pneg %p284
        %p703 = pneg %p308
        %p704 = pneg %p305
        %p705 = pneg %p329
        %p706 = pneg %p326
        %p707 = pneg %p350
        %p708 = pneg %p347
        %p709 = pneg %p371
        %p710 = pneg %p368
        %p711 = pneg %p392
        %p712 = pneg %p389
        %p713 = pneg %p418
        %p714 = pneg %p415
        %p715 = scmp.lt.s32.totalorder %s35, 1
        %s716 = scalar_select %p715, %s35, 1
        %s717 = smul.addr %s716, 2
        %s718 = smul.addr %s717, 8
        %s719 = scalar_lea.vmem %s17, %s718
        %p720 = scmp.lt.s32.totalorder %s35, 1
        %s721 = scalar_select %p720, %s35, 1
        %s722 = smul.addr %s721, 8
        %s723 = scalar_lea.vmem %s0, %s722
        %p724 = scmp.lt.s32.totalorder %s35, 1
        %s725 = scalar_select %p724, %s35, 1
        %s726 = smul.addr %s725, 2
        %s727 = smul.addr %s726, 8
        %s728 = scalar_lea.vmem %s17, %s727
        %v729 = vld [vmem:[%s723] sm:$0xff]
        %v730 = vld [vmem:[#allocation2] sm:$0x3f]
        %v731 = vld [vmem:[#allocation4] sm:$0x1]
        %v733 = vperm.slane %v731, 0
        %vm735 = vcmask 48128
        %v737 = vsel %vm735, %v729, 0
        %vm739 = vcmask 1045504
        %v741 = vsel %vm739, %v730, 0
        %743 = vmatpush.msra.mxu0 0.0
        %744 = vmatpush.msra.mxu0 0.0
        %745 = vmatpush.msra.mxu0 0.0
        %746 = vmatpush.msra.mxu0 0.0
        %747 = vmatpush.msra.mxu0 0.0
        %748 = vmatpush.msra.mxu0 0.0
        %749 = vmatpush.msra.mxu0 0.0
        %750 = vmatpush.msra.mxu0 0.0
        %751 = vmatpush.msra.mxu0 0.0
        %752 = vmatpush.msra.mxu0 0.0
        %753 = vmatpush.msra.mxu0 0.0
        %754 = vmatpush.msra.mxu0 0.0
        %755 = vmatpush.msra.mxu0 0.0
        %756 = vmatpush.msra.mxu0 0.0
        %757 = vmatpush.msra.mxu0 0.0
        %758 = vmatpush.msra.mxu0 %v741
        %759 = vmatmul.f32.gmra.mxu0 %v737
        %v760 = vpop.f32.mrf.mxu0
        %v761 = vadd.f32 %v733, %v760
        %762 = vdwg.mxu0
        %v763 = vmax.f32 %v761, 0.0
        %v764 = vld [vmem:[#allocation6] sm:$0xff]
        %v765 = vld [vmem:[#allocation6 + $0x8] sm:$0xff]
        %v766 = vld [vmem:[#allocation7] sm:$0x1]
        %v768 = vperm.slane %v766, 0
        %vm770 = vcmask 130048
        %v772 = vsel %vm770, %v763, 0
        %774 = vmatpush.msra.mxu0 0.0
        %775 = vmatpush.msra.mxu0 0.0
        %776 = vmatpush.msra.mxu0 0.0
        %777 = vmatpush.msra.mxu0 0.0
        %778 = vmatpush.msra.mxu0 0.0
        %779 = vmatpush.msra.mxu0 0.0
        %780 = vmatpush.msra.mxu0 0.0
        %781 = vmatpush.msra.mxu0 0.0
        %782 = vmatpush.msra.mxu0 0.0
        %783 = vmatpush.msra.mxu0 0.0
        %784 = vmatpush.msra.mxu0 0.0
        %785 = vmatpush.msra.mxu0 0.0
        %786 = vmatpush.msra.mxu0 0.0
        %787 = vmatpush.msra.mxu0 0.0
        %788 = vmatpush.msra.mxu0 %v765
        %789 = vmatpush.msra.mxu0 %v764
        %790 = vmatmul.f32.gmra.mxu0 %v772
        %v791 = vpop.f32.mrf.mxu0
        %v792 = vadd.f32 %v768, %v791
        %793 = vdwg.mxu0
        %v794 = vmax.f32 %v792, 0.0
        %v795 = vld [vmem:[%s5] sm:$0xff]
        %v796 = vld [vmem:[%s5 + $0x8] sm:$0xff]
        %v797 = vld [vmem:[#allocation9] sm:$0x1]
        %v799 = vperm.slane %v797, 0
        %v802 = vsel %vm770, %v794, 0
        %804 = vmatpush.msra.mxu0 0.0
        %805 = vmatpush.msra.mxu0 0.0
        %806 = vmatpush.msra.mxu0 0.0
        %807 = vmatpush.msra.mxu0 0.0
        %808 = vmatpush.msra.mxu0 0.0
        %809 = vmatpush.msra.mxu0 0.0
        %810 = vmatpush.msra.mxu0 0.0
        %811 = vmatpush.msra.mxu0 0.0
        %812 = vmatpush.msra.mxu0 0.0
        %813 = vmatpush.msra.mxu0 0.0
        %814 = vmatpush.msra.mxu0 0.0
        %815 = vmatpush.msra.mxu0 0.0
        %816 = vmatpush.msra.mxu0 0.0
        %817 = vmatpush.msra.mxu0 0.0
        %818 = vmatpush.msra.mxu0 %v796
        %819 = vmatpush.msra.mxu0 %v795
        %820 = vmatmul.f32.gmra.mxu0 %v802
        %v821 = vpop.f32.mrf.mxu0
        %v822 = vadd.f32 %v799, %v821
        %823 = vdwg.mxu0
        %v824 = vmax.f32 %v822, 0.0
        %v825 = vld [vmem:[#allocation10] sm:$0xff]
        %v826 = vld [vmem:[#allocation10 + $0x8] sm:$0xff]
        %v827 = vld [vmem:[#allocation10 + $0x10] sm:$0xff]
        %v828 = vld [vmem:[#allocation10 + $0x18] sm:$0xff]
        %v829 = vld [vmem:[#allocation10 + $0x20] sm:$0xff]
        %v830 = vld [vmem:[#allocation10 + $0x28] sm:$0xf]
        %v831 = vld [vmem:[#allocation12] sm:$0x1]
        %v833 = vperm.slane %v831, 0
        %vm835 = vcmask 359424
        %v837 = vsel %vm835, %v824, 0
        %vm839 = vcmask 1043456
        %v841 = vsel %vm839, %v830, 0
        %843 = vmatpush.msra.mxu0 0.0
        %844 = vmatpush.msra.mxu0 0.0
        %845 = vmatpush.msra.mxu0 0.0
        %846 = vmatpush.msra.mxu0 0.0
        %847 = vmatpush.msra.mxu0 0.0
        %848 = vmatpush.msra.mxu0 0.0
        %849 = vmatpush.msra.mxu0 0.0
        %850 = vmatpush.msra.mxu0 0.0
        %851 = vmatpush.msra.mxu0 0.0
        %852 = vmatpush.msra.mxu0 0.0
        %853 = vmatpush.msra.mxu0 %v841
        %854 = vmatpush.msra.mxu0 %v829
        %855 = vmatpush.msra.mxu0 %v828
        %856 = vmatpush.msra.mxu0 %v827
        %857 = vmatpush.msra.mxu0 %v826
        %858 = vmatpush.msra.mxu0 %v825
        %859 = vmatmul.f32.gmra.mxu0 %v837
        %v860 = vpop.f32.mrf.mxu0
        %v861 = vadd.f32 %v833, %v860
        %862 = vdwg.mxu0
        %v863 = vmax.f32 %v861, 0.0
        %v864 = vld [vmem:[#allocation13] sm:$0xff]
        %v865 = vld [vmem:[#allocation13 + $0x8] sm:$0xff]
        %v866 = vld [vmem:[#allocation13 + $0x10] sm:$0xff]
        %v867 = vld [vmem:[#allocation13 + $0x18] sm:$0xff]
        %v868 = vld [vmem:[#allocation13 + $0x20] sm:$0xff]
        %v869 = vld [vmem:[#allocation13 + $0x28] sm:$0xf]
        %v870 = vld [vmem:[#allocation15] sm:$0x1]
        %v872 = vperm.slane %v870, 0
        %v875 = vsel %vm835, %v863, 0
        %v878 = vsel %vm839, %v869, 0
        %880 = vmatpush.msra.mxu0 0.0
        %881 = vmatpush.msra.mxu0 0.0
        %882 = vmatpush.msra.mxu0 0.0
        %883 = vmatpush.msra.mxu0 0.0
        %884 = vmatpush.msra.mxu0 0.0
        %885 = vmatpush.msra.mxu0 0.0
        %886 = vmatpush.msra.mxu0 0.0
        %887 = vmatpush.msra.mxu0 0.0
        %888 = vmatpush.msra.mxu0 0.0
        %889 = vmatpush.msra.mxu0 0.0
        %890 = vmatpush.msra.mxu0 %v878
        %891 = vmatpush.msra.mxu0 %v868
        %892 = vmatpush.msra.mxu0 %v867
        %893 = vmatpush.msra.mxu0 %v866
        %894 = vmatpush.msra.mxu0 %v865
        %895 = vmatpush.msra.mxu0 %v864
        %896 = vmatmul.f32.gmra.mxu0 %v875
        %v897 = vpop.f32.mrf.mxu0
        %v898 = vadd.f32 %v872, %v897
        %899 = vdwg.mxu0
        %v900 = vmax.f32 %v898, 0.0
        %v901 = vld [vmem:[#allocation16] sm:$0xff]
        %v902 = vld [vmem:[#allocation16 + $0x8] sm:$0xff]
        %v903 = vld [vmem:[#allocation16 + $0x10] sm:$0xff]
        %v904 = vld [vmem:[#allocation16 + $0x18] sm:$0xff]
        %v905 = vld [vmem:[#allocation16 + $0x20] sm:$0xff]
        %v906 = vld [vmem:[#allocation16 + $0x28] sm:$0xf]
        %v907 = vld [vmem:[#allocation18] sm:$0x1]
        %v909 = vperm.slane %v907, 0
        %v912 = vsel %vm835, %v900, 0
        %v915 = vsel %vm839, %v906, 0
        %917 = vmatpush.msra.mxu0 0.0
        %918 = vmatpush.msra.mxu0 0.0
        %919 = vmatpush.msra.mxu0 0.0
        %920 = vmatpush.msra.mxu0 0.0
        %921 = vmatpush.msra.mxu0 0.0
        %922 = vmatpush.msra.mxu0 0.0
        %923 = vmatpush.msra.mxu0 0.0
        %924 = vmatpush.msra.mxu0 0.0
        %925 = vmatpush.msra.mxu0 0.0
        %926 = vmatpush.msra.mxu0 0.0
        %927 = vmatpush.msra.mxu0 %v915
        %928 = vmatpush.msra.mxu0 %v905
        %929 = vmatpush.msra.mxu0 %v904
        %930 = vmatpush.msra.mxu0 %v903
        %931 = vmatpush.msra.mxu0 %v902
        %932 = vmatpush.msra.mxu0 %v901
        %933 = vmatmul.f32.gmra.mxu0 %v912
        %v934 = vpop.f32.mrf.mxu0
        %v935 = vadd.f32 %v909, %v934
        %936 = vdwg.mxu0
        %v937 = vmul.f32 %v935, 0.16666667
        %v938 = vadd.f32 %v937, 0.5
        %v939 = vmax.f32 %v938, 0.0
        %v940 = vmin.f32 %v939, 1.0
        %v941 = vld [vmem:[#allocation19] sm:$0x1]
        %v942 = vld [vmem:[#allocation19 + $0x1] sm:$0x1]
        %v943 = vperm.slane %v942, 0
        %v944 = vmul.f32 %v943, %v940
        %v945 = vperm.slane %v941, 0
        %v946 = vadd.f32 %v944, %v945
        %v947 = vld [vmem:[%s14] sm:$0xf]
        %v948 = vunpack.c.l.bf16 %v947
        %vm949 = vcmask 64512
        %v951 = vsel %vm949, %v946, 0
        %953 = vmatpush.msra.mxu0 0.0
        %954 = vmatpush.msra.mxu0 0.0
        %955 = vmatpush.msra.mxu0 0.0
        %956 = vmatpush.msra.mxu0 0.0
        %957 = vmatpush.msra.mxu0 0.0
        %958 = vmatpush.msra.mxu0 0.0
        %959 = vmatpush.msra.mxu0 0.0
        %960 = vmatpush.msra.mxu0 0.0
        %961 = vmatpush.msra.mxu0 0.0
        %962 = vmatpush.msra.mxu0 0.0
        %963 = vmatpush.msra.mxu0 0.0
        %964 = vmatpush.msra.mxu0 0.0
        %965 = vmatpush.msra.mxu0 0.0
        %966 = vmatpush.msra.mxu0 0.0
        %967 = vmatpush.msra.mxu0 0.0
        %968 = vmatpush.msra.mxu0 %v948
        %969 = vmatmul.f32.gmra.mxu0 %v951
        %v970 = vpop.f32.mrf.mxu0
        %v971 = vadd.f32 0.0, %v970
        %972 = vdwg.mxu0
        %v973 = vld [vmem:[%s15] sm:$0xf]
        %v974 = vld [vmem:[%s15 + $0x4] sm:$0xf]
        %v975 = vunpack.c.l.bf16 %v973
        %v976 = vunpack.c.l.bf16 %v974
        %977 = vrot.lane.b32.xlu0 %v946, 120
        %v978 = vpop.permute.xlu0 %977
        %v979 = vsel %vm770, %v978, 0
        %981 = vmatpush.msra.mxu0 0.0
        %982 = vmatpush.msra.mxu0 0.0
        %983 = vmatpush.msra.mxu0 0.0
        %984 = vmatpush.msra.mxu0 0.0
        %985 = vmatpush.msra.mxu0 0.0
        %986 = vmatpush.msra.mxu0 0.0
        %987 = vmatpush.msra.mxu0 0.0
        %988 = vmatpush.msra.mxu0 0.0
        %989 = vmatpush.msra.mxu0 0.0
        %990 = vmatpush.msra.mxu0 0.0
        %991 = vmatpush.msra.mxu0 0.0
        %992 = vmatpush.msra.mxu0 0.0
        %993 = vmatpush.msra.mxu0 0.0
        %994 = vmatpush.msra.mxu0 0.0
        %995 = vmatpush.msra.mxu0 %v976
        %996 = vmatpush.msra.mxu0 %v975
        %997 = vmatmul.f32.gmra.mxu0 %v979
        %v998 = vpop.f32.mrf.mxu0
        %v999 = vadd.f32 0.0, %v998
        %1000 = vdwg.mxu0
        %v1001 = vld [vmem:[%s16] sm:$0x1]
        %v1002 = vld [vmem:[%s16 + $0x1] sm:$0x1]
        %v1003 = vand.u32 2147483647, %v946
        %vm1004 = vcmp.le.f32.partialorder %v1003, 0.7853982
        %vm1005 = vcmp.lt.s32.totalorder %v946, 0
        %v1006 = vand.u32 %v946, 2139095040
        %v1007 = vshrl.u32 %v1006, 23
        %v1008 = vsub.s32 %v1007, 127
        %v1009 = vand.u32 2147483647, %v946
        %v1010 = vand.u32 %v1009, 8388607
        %v1011 = vor.u32 %v1010, 8388608
        %v1012 = vsub.s32 0, %v1011
        %v1013 = vadd.s32 %v1008, 1
        %vm1014 = vcmp.gt.s32.totalorder %v1013, 0
        %v1015 = vsel %vm1014, %v1013, 0
        %v1016 = vshrl.u32 %v1015, 5
        %v1017 = vand.u32 %v1015, 31
        %v1018 = vsub.s32 32, %v1017
        %v1019 = vshrl.u32 683565275, %v1018
        %v1020 = vshll.u32 683565275, %v1017
        %v1021 = vshrl.u32 2475754826, %v1018
        %v1022 = vor.u32 %v1020, %v1021
        %v1023 = vshll.u32 2475754826, %v1017
        %v1024 = vshrl.u32 2131351028, %v1018
        %v1025 = vor.u32 %v1023, %v1024
        %v1026 = vshll.u32 2131351028, %v1017
        %v1027 = vshrl.u32 2102212464, %v1018
        %v1028 = vor.u32 %v1026, %v1027
        %v1029 = vshll.u32 2102212464, %v1017
        %v1030 = vshrl.u32 920167782, %v1018
        %v1031 = vor.u32 %v1029, %v1030
        %v1032 = vshll.u32 920167782, %v1017
        %v1033 = vshrl.u32 1326507024, %v1018
        %v1034 = vor.u32 %v1032, %v1033
        %vm1035 = vcmp.lt.s32.totalorder %v1016, 1
        %vm1036 = vcmp.lt.s32.totalorder %v1016, 2
        %vm1037 = vcmp.lt.s32.totalorder %v1016, 3
        %vm1038 = vcmp.lt.s32.totalorder %v1016, 4
        %v1039 = vsel %vm1035, %v1019, %v1022
        %v1040 = vsel %vm1038, %v1028, 2102212464
        %v1041 = vsel %vm1037, %v1025, %v1040
        %v1042 = vsel %vm1036, %v1039, %v1041
        %v1043 = vsel %vm1035, %v1022, %v1025
        %v1044 = vsel %vm1038, %v1031, 920167782
        %v1045 = vsel %vm1037, %v1028, %v1044
        %v1046 = vsel %vm1036, %v1043, %v1045
        %v1047 = vsel %vm1035, %v1025, %v1028
        %v1048 = vsel %vm1038, %v1034, 1326507024
        %v1049 = vsel %vm1037, %v1031, %v1048
        %v1050 = vsel %vm1036, %v1047, %v1049
        %v1051 = vshll.u32 %v1011, 8
        %v1052 = vand.u32 %v1051, 65535
        %v1053 = vshrl.u32 %v1051, 16
        %v1054 = vand.u32 %v1050, 65535
        %v1055 = vshrl.u32 %v1050, 16
        %v1056 = vmul.u32 %v1052, %v1054
        %v1057 = vmul.u32 %v1052, %v1055
        %v1058 = vmul.u32 %v1053, %v1054
        %v1059 = vmul.u32 %v1053, %v1055
        %v1060 = vshll.u32 %v1057, 16
        %v1061 = vshrl.u32 %v1057, 16
        %v1062 = vshll.u32 %v1058, 16
        %v1063 = vshrl.u32 %v1058, 16
        %vm1064 = vc.u32 %v1056, %v1060
        %v1065 = vsel %vm1064, 1, 0
        %v1066 = vadd.s32 %v1056, %v1060
        %v1067 = vadd.s32 %v1059, %v1065
        %vm1068 = vc.u32 %v1066, %v1062
        %v1069 = vsel %vm1068, 1, 0
        %v1070 = vadd.s32 %v1066, %v1062
        %v1071 = vadd.s32 %v1067, %v1069
        %v1072 = vadd.s32 %v1071, %v1061
        %v1073 = vadd.s32 %v1072, %v1063
        %v1074 = vand.u32 %v1051, 65535
        %v1075 = vshrl.u32 %v1051, 16
        %v1076 = vand.u32 %v1046, 65535
        %v1077 = vshrl.u32 %v1046, 16
        %v1078 = vmul.u32 %v1074, %v1076
        %v1079 = vmul.u32 %v1074, %v1077
        %v1080 = vmul.u32 %v1075, %v1076
        %v1081 = vmul.u32 %v1075, %v1077
        %v1082 = vshll.u32 %v1079, 16
        %v1083 = vshrl.u32 %v1079, 16
        %v1084 = vshll.u32 %v1080, 16
        %v1085 = vshrl.u32 %v1080, 16
        %vm1086 = vc.u32 %v1078, %v1082
        %v1087 = vsel %vm1086, 1, 0
        %v1088 = vadd.s32 %v1078, %v1082
        %v1089 = vadd.s32 %v1081, %v1087
        %vm1090 = vc.u32 %v1088, %v1084
        %v1091 = vsel %vm1090, 1, 0
        %v1092 = vadd.s32 %v1088, %v1084
        %v1093 = vadd.s32 %v1089, %v1091
        %v1094 = vadd.s32 %v1093, %v1083
        %v1095 = vadd.s32 %v1094, %v1085
        %v1096 = vmul.u32 %v1051, %v1042
        %v1097 = vadd.s32 %v1073, %v1092
        %vm1098 = vc.u32 %v1073, %v1092
        %v1099 = vadd.s32 %v1095, 1
        %v1100 = vsel %vm1098, %v1099, %v1095
        %v1101 = vadd.s32 %v1096, %v1100
        %v1102 = vadd.s32 %v1101, 536870912
        %v1103 = vshrl.u32 %v1102, 30
        %v1104 = vshll.u32 %v1103, 30
        %v1105 = vsub.s32 %v1101, %v1104
        %vm1106 = vcmp.lt.s32.totalorder %v1105, 0
        %v1107 = vsub.s32 0, %v1105
        %v1108 = vsel %vm1106, %v1107, %v1105
        %v1109 = vclz %v1108
        %v1110 = vsub.s32 %v1109, 2
        %vm1111 = vcmp.gt.s32.totalorder 0, %v1110
        %v1112 = vsel %vm1111, 0, %v1110
        %v1113 = vsub.s32 32, %v1112
        %v1114 = vshll.u32 %v1105, %v1112
        %v1115 = vshrl.u32 %v1097, %v1113
        %v1116 = vor.u32 %v1114, %v1115
        %v1117 = vsub.s32 4294967266, %v1112
        %v1118 = vadd.s32 %v1117, 127
        %v1119 = vshll.u32 %v1118, 23
        %v1120 = vor.u32 4788187, %v1119
        %v1121 = vand.u32 2147483647, %v1120
        %v1123 = vcvt.s32.f32 %v1116
        %v1124 = vmul.f32 %v1123, %v1121
        %v1125 = vxor.u32 %v1124, 2147483648
        %v1126 = vsel %vm1005, %v1125, %v1124
        %v1127 = vsub.s32 4, %v1103
        %v1128 = vsel %vm1005, %v1127, %v1103
        %v1129 = vsel %vm1004, %v946, %v1126
        %v1130 = vsel %vm1004, 0, %v1128
        %v1131 = vmul.f32 %v1129, %v1129
        %v1132 = vmul.f32 %v1131, -0.001358992
        %v1133 = vadd.f32 %v1132, 0.041655596
        %v1134 = vmul.f32 %v1131, %v1133
        %v1135 = vadd.f32 %v1134, -0.4999988
        %v1136 = vmul.f32 %v1131, %v1135
        %v1137 = vadd.f32 1.0, %v1136
        %v1138 = vmul.f32 %v1129, %v1129
        %v1139 = vmul.f32 %v1138, -0.00019511016
        %v1140 = vadd.f32 %v1139, 0.008332121
        %v1141 = vmul.f32 %v1138, %v1140
        %v1142 = vadd.f32 %v1141, -0.16666654
        %v1143 = vmul.f32 %v1138, %v1142
        %v1144 = vadd.f32 %v1143, 1.0
        %v1145 = vmul.f32 %v1144, %v1129
        %vm1146 = vweird.f32 %v946
        %v1147 = vand.u32 %v1130, 3
        %vm1148 = vcmp.lt.s32.totalorder %v1147, 2
        %vm1149 = vcmp.eq.s32.totalorder %v1147, 0
        %v1150 = vxor.u32 %v1145, 2147483648
        %v1151 = vsel %vm1149, %v1137, %v1150
        %vm1152 = vcmp.eq.s32.totalorder %v1147, 2
        %v1153 = vxor.u32 %v1137, 2147483648
        %v1154 = vsel %vm1152, %v1153, %v1145
        %v1155 = vsel %vm1148, %v1151, %v1154
        %v1156 = vsel %vm1146, nan, %v1155
        %v1157 = vand.u32 2147483647, %v946
        %vm1158 = vcmp.le.f32.partialorder %v1157, 0.7853982
        %vm1159 = vcmp.lt.s32.totalorder %v946, 0
        %v1160 = vand.u32 %v946, 2139095040
        %v1161 = vshrl.u32 %v1160, 23
        %v1162 = vsub.s32 %v1161, 127
        %v1163 = vand.u32 2147483647, %v946
        %v1164 = vand.u32 %v1163, 8388607
        %v1165 = vor.u32 %v1164, 8388608
        %v1166 = vsub.s32 0, %v1165
        %v1167 = vadd.s32 %v1162, 1
        %vm1168 = vcmp.gt.s32.totalorder %v1167, 0
        %v1169 = vsel %vm1168, %v1167, 0
        %v1170 = vshrl.u32 %v1169, 5
        %v1171 = vand.u32 %v1169, 31
        %v1172 = vsub.s32 32, %v1171
        %v1173 = vshrl.u32 683565275, %v1172
        %v1174 = vshll.u32 683565275, %v1171
        %v1175 = vshrl.u32 2475754826, %v1172
        %v1176 = vor.u32 %v1174, %v1175
        %v1177 = vshll.u32 2475754826, %v1171
        %v1178 = vshrl.u32 2131351028, %v1172
        %v1179 = vor.u32 %v1177, %v1178
        %v1180 = vshll.u32 2131351028, %v1171
        %v1181 = vshrl.u32 2102212464, %v1172
        %v1182 = vor.u32 %v1180, %v1181
        %v1183 = vshll.u32 2102212464, %v1171
        %v1184 = vshrl.u32 920167782, %v1172
        %v1185 = vor.u32 %v1183, %v1184
        %v1186 = vshll.u32 920167782, %v1171
        %v1187 = vshrl.u32 1326507024, %v1172
        %v1188 = vor.u32 %v1186, %v1187
        %vm1189 = vcmp.lt.s32.totalorder %v1170, 1
        %vm1190 = vcmp.lt.s32.totalorder %v1170, 2
        %vm1191 = vcmp.lt.s32.totalorder %v1170, 3
        %vm1192 = vcmp.lt.s32.totalorder %v1170, 4
        %v1193 = vsel %vm1189, %v1173, %v1176
        %v1194 = vsel %vm1192, %v1182, 2102212464
        %v1195 = vsel %vm1191, %v1179, %v1194
        %v1196 = vsel %vm1190, %v1193, %v1195
        %v1197 = vsel %vm1189, %v1176, %v1179
        %v1198 = vsel %vm1192, %v1185, 920167782
        %v1199 = vsel %vm1191, %v1182, %v1198
        %v1200 = vsel %vm1190, %v1197, %v1199
        %v1201 = vsel %vm1189, %v1179, %v1182
        %v1202 = vsel %vm1192, %v1188, 1326507024
        %v1203 = vsel %vm1191, %v1185, %v1202
        %v1204 = vsel %vm1190, %v1201, %v1203
        %v1205 = vshll.u32 %v1165, 8
        %v1206 = vand.u32 %v1205, 65535
        %v1207 = vshrl.u32 %v1205, 16
        %v1208 = vand.u32 %v1204, 65535
        %v1209 = vshrl.u32 %v1204, 16
        %v1210 = vmul.u32 %v1206, %v1208
        %v1211 = vmul.u32 %v1206, %v1209
        %v1212 = vmul.u32 %v1207, %v1208
        %v1213 = vmul.u32 %v1207, %v1209
        %v1214 = vshll.u32 %v1211, 16
        %v1215 = vshrl.u32 %v1211, 16
        %v1216 = vshll.u32 %v1212, 16
        %v1217 = vshrl.u32 %v1212, 16
        %vm1218 = vc.u32 %v1210, %v1214
        %v1219 = vsel %vm1218, 1, 0
        %v1220 = vadd.s32 %v1210, %v1214
        %v1221 = vadd.s32 %v1213, %v1219
        %vm1222 = vc.u32 %v1220, %v1216
        %v1223 = vsel %vm1222, 1, 0
        %v1224 = vadd.s32 %v1220, %v1216
        %v1225 = vadd.s32 %v1221, %v1223
        %v1226 = vadd.s32 %v1225, %v1215
        %v1227 = vadd.s32 %v1226, %v1217
        %v1228 = vand.u32 %v1205, 65535
        %v1229 = vshrl.u32 %v1205, 16
        %v1230 = vand.u32 %v1200, 65535
        %v1231 = vshrl.u32 %v1200, 16
        %v1232 = vmul.u32 %v1228, %v1230
        %v1233 = vmul.u32 %v1228, %v1231
        %v1234 = vmul.u32 %v1229, %v1230
        %v1235 = vmul.u32 %v1229, %v1231
        %v1236 = vshll.u32 %v1233, 16
        %v1237 = vshrl.u32 %v1233, 16
        %v1238 = vshll.u32 %v1234, 16
        %v1239 = vshrl.u32 %v1234, 16
        %vm1240 = vc.u32 %v1232, %v1236
        %v1241 = vsel %vm1240, 1, 0
        %v1242 = vadd.s32 %v1232, %v1236
        %v1243 = vadd.s32 %v1235, %v1241
        %vm1244 = vc.u32 %v1242, %v1238
        %v1245 = vsel %vm1244, 1, 0
        %v1246 = vadd.s32 %v1242, %v1238
        %v1247 = vadd.s32 %v1243, %v1245
        %v1248 = vadd.s32 %v1247, %v1237
        %v1249 = vadd.s32 %v1248, %v1239
        %v1250 = vmul.u32 %v1205, %v1196
        %v1251 = vadd.s32 %v1227, %v1246
        %vm1252 = vc.u32 %v1227, %v1246
        %v1253 = vadd.s32 %v1249, 1
        %v1254 = vsel %vm1252, %v1253, %v1249
        %v1255 = vadd.s32 %v1250, %v1254
        %v1256 = vadd.s32 %v1255, 536870912
        %v1257 = vshrl.u32 %v1256, 30
        %v1258 = vshll.u32 %v1257, 30
        %v1259 = vsub.s32 %v1255, %v1258
        %vm1260 = vcmp.lt.s32.totalorder %v1259, 0
        %v1261 = vsub.s32 0, %v1259
        %v1262 = vsel %vm1260, %v1261, %v1259
        %v1263 = vclz %v1262
        %v1264 = vsub.s32 %v1263, 2
        %vm1265 = vcmp.gt.s32.totalorder 0, %v1264
        %v1266 = vsel %vm1265, 0, %v1264
        %v1267 = vsub.s32 32, %v1266
        %v1268 = vshll.u32 %v1259, %v1266
        %v1269 = vshrl.u32 %v1251, %v1267
        %v1270 = vor.u32 %v1268, %v1269
        %v1271 = vsub.s32 4294967266, %v1266
        %v1272 = vadd.s32 %v1271, 127
        %v1273 = vshll.u32 %v1272, 23
        %v1274 = vor.u32 4788187, %v1273
        %v1275 = vand.u32 2147483647, %v1274
        %v1277 = vcvt.s32.f32 %v1270
        %v1278 = vmul.f32 %v1277, %v1275
        %v1279 = vxor.u32 %v1278, 2147483648
        %v1280 = vsel %vm1159, %v1279, %v1278
        %v1281 = vsub.s32 4, %v1257
        %v1282 = vsel %vm1159, %v1281, %v1257
        %v1283 = vsel %vm1158, %v946, %v1280
        %v1284 = vsel %vm1158, 0, %v1282
        %v1285 = vmul.f32 %v1283, %v1283
        %v1286 = vmul.f32 %v1285, -0.001358992
        %v1287 = vadd.f32 %v1286, 0.041655596
        %v1288 = vmul.f32 %v1285, %v1287
        %v1289 = vadd.f32 %v1288, -0.4999988
        %v1290 = vmul.f32 %v1285, %v1289
        %v1291 = vadd.f32 1.0, %v1290
        %v1292 = vmul.f32 %v1283, %v1283
        %v1293 = vmul.f32 %v1292, -0.00019511016
        %v1294 = vadd.f32 %v1293, 0.008332121
        %v1295 = vmul.f32 %v1292, %v1294
        %v1296 = vadd.f32 %v1295, -0.16666654
        %v1297 = vmul.f32 %v1292, %v1296
        %v1298 = vadd.f32 %v1297, 1.0
        %v1299 = vmul.f32 %v1298, %v1283
        %vm1300 = vweird.f32 %v946
        %v1301 = vadd.s32 %v1284, 3
        %v1302 = vand.u32 %v1301, 3
        %vm1303 = vcmp.lt.s32.totalorder %v1302, 2
        %vm1304 = vcmp.eq.s32.totalorder %v1302, 0
        %v1305 = vxor.u32 %v1299, 2147483648
        %v1306 = vsel %vm1304, %v1291, %v1305
        %vm1307 = vcmp.eq.s32.totalorder %v1302, 2
        %v1308 = vxor.u32 %v1291, 2147483648
        %v1309 = vsel %vm1307, %v1308, %v1299
        %v1310 = vsel %vm1303, %v1306, %v1309
        %v1311 = vsel %vm1300, nan, %v1310
        %v1312 = vperm.slane %v1001, 0
        %1314 = vrot.lane.b32.xlu0 %v1156, 104
        %v1315 = vpop.permute.xlu0 %1314
        %v1317 = vmul.f32 %v1312, %v1315
        %1319 = vrot.lane.b32.xlu0 %v1311, 104
        %v1320 = vpop.permute.xlu0 %1319
        %v1322 = vmul.f32 %v1312, %v1320
        %v1323 = vperm.slane %v1002, 0
        %v1324 = vmul.f32 %v1323, %v1315
        %v1325 = vmul.f32 %v1323, %v1320
        %v1326 = vmul.f32 %v999, %v999
        %1328 = vrot.lane.b32.xlu0 %v999, 108
        %v1329 = vpop.permute.xlu0 %1328
        %v1331 = vmul.f32 %v999, %v1329
        %v1332 = vmul.f32 %v1312, %v1326
        %v1333 = vadd.f32 %v1317, %v1325
        %v1334 = vmul.f32 %v1331, %v1333
        %v1335 = vsub.f32 %v1332, %v1334
        %v1336 = vsub.f32 0.0, %v1002
        %v1337 = vperm.slane %v1336, 0
        %v1338 = vmul.f32 %v1337, %v1326
        %v1339 = vsub.f32 %v1322, %v1324
        %v1340 = vmul.f32 %v1331, %v1339
        %v1341 = vsub.f32 %v1338, %v1340
        %1343 = vrot.lane.b32.xlu0 %v1326, 108
        %v1344 = vpop.permute.xlu0 %1343
        %v1346 = vmul.f32 %v1312, %v1344
        %v1347 = vsub.f32 %v1317, %v1325
        %v1348 = vmul.f32 %v1331, %v1347
        %v1349 = vsub.f32 %v1346, %v1348
        %v1350 = vmul.f32 %v1337, %v1344
        %v1351 = vadd.f32 %v1322, %v1324
        %v1352 = vmul.f32 %v1331, %v1351
        %v1353 = vadd.f32 %v1350, %v1352
        %1355 = vrot.lane.b32.xlu0 %v971, 44
        %v1356 = vpop.permute.xlu0 %1355
        %1359 = vrot.lane.b32.xlu0 %v1335, 76
        %v1360 = vpop.permute.xlu0 %1359
        %1363 = vrot.lane.b32.xlu0 %v1341, 96
        %v1364 = vpop.permute.xlu0 %1363
        %1367 = vrot.lane.b32.xlu0 %v1349, 116
        %v1368 = vpop.permute.xlu0 %1367
        %1371 = vrot.lane.b32.xlu0 %v1353, 8
        %v1372 = vpop.permute.xlu0 %1371
        %v1374 = vsel %vm835, %v946, %v1356
        %vm1375 = vcmask 621568
        %v1376 = vsel %vm1375, %v1374, %v1360
        %vm1377 = vcmask 785408
        %v1378 = vsel %vm1377, %v1376, %v1364
        %vm1379 = vcmask 949248
        %v1380 = vsel %vm1379, %v1378, %v1368
        %v1381 = vsel %vm949, %v1368, %v1372
        %vm1382 = vcmask 228352
        %v1383 = vsel %vm1382, %v1381, 0.0
        %1384 = vst [vmem:[%s728] sm:$0xff] %v1380
        %1385 = vst [vmem:[%s728 + $0x8] sm:$0xff] %v1383
        %p1386 = scmp.lt.s32.totalorder %s35, 1
        %s1387 = scalar_select %p1386, %s35, 1
        %s1388 = smul.addr %s1387, 2
        %s1389 = smul.addr %s1388, 8
        %s1390 = scalar_lea.vmem %s17, %s1389
        // Predicated region
        $region137: #{_lambda_.1} parent=87 // pred_check
          %p1391 = pneg %p415
        $region138: #{_lambda_.1} parent=87 // pred_check_branch
          %1393 = sbr.rel (%p1391) target = $region140
        $region139: #{_lambda_.1} parent=87 // pred_region
          _
        $region140: #{_lambda_.1} parent=87 // pred_fallthru
          _
      $region88: #{_lambda_.1} parent=5 // pred_fallthru
        _
      %p1394 = scmp.le.s32.totalorder 2, %s30
      // Predicated region
      $region141: #{_lambda_.1} parent=5 // pred_check
        %p1395 = pneg %p1394
      $region142: #{_lambda_.1} parent=5 // pred_check_branch
        %1397 = sbr.rel (%p1395) target = $region144
      $region143: #{_lambda_.1} parent=5 // pred_region
        %s1398 = ssub.s32 %s30, 2
        // Predicated region
        $region145: #{_lambda_.1} parent=143 // pred_check
          %p1399 = pneg %p421
        $region146: #{_lambda_.1} parent=143 // pred_check_branch
          %1401 = sbr.rel (%p1399) target = $region148
        $region147: #{_lambda_.1} parent=143 // pred_region
          %p1402 = scmp.lt.s32.totalorder %s36, 1
          %s1403 = scalar_select %p1402, %s36, 1
          %s1404 = smul.addr %s1403, 2
          %s1405 = smul.addr %s1404, 8
          %s1406 = scalar_lea.vmem %s17, %s1405
        $region148: #{_lambda_.1} parent=143 // pred_fallthru
          _
      $region144: #{_lambda_.1} parent=5 // pred_fallthru
        _
    $region6: #{_lambda_.1} parent=1 // loop_footer
      %s34 = sadd.s32 1, %s30
    $region7: #{_lambda_.1} parent=1 // loop_footer_branch
      %29 = sbr.rel target = $region3
    $region8: #{_lambda_.1} parent=1 // loop_exit
      _
    %1407 = vsyncpa [#allocation3], 1
    %s1408 = scalar_lea.sflag [#allocation3], 1
    %1409 = vsyncpa %s1408, 1
    %1410 = vsyncpa [#allocation5], 1
    %1411 = vsyncpa [#allocation8], 1
    %1412 = vsyncpa [#allocation11], 1
    %1413 = vsyncpa [#allocation14], 1
    %1414 = vsyncpa [#allocation17], 1
    %1415 = vsyncpa [#allocation20], 1

</llo_original>
